<compile_context>
chip_gen: v5e
topology: v5e:2x2
jax: 0.10.0
libtpu: 0.0.40
codegen_flags: <defaults>
</compile_context>

<pallas_src>
import functools
from typing import NamedTuple

import jax
import jax.numpy as jnp
from jax.experimental import pallas as pl
from jax.experimental.pallas import tpu as pltpu

_LANE = 128


def _round_up(a, b):
    return ((a + b - 1) // b) * b


def _vmem_capacity_bytes():
    try:
        return int(pltpu.get_tpu_info().vmem_capacity_bytes)
    except Exception:
        return 64 * 1024 * 1024  # v7x per-TC capacity (most conservative)


class _Plan(NamedTuple):
    n: int
    n_classes: int
    n_pad: int
    f_in_p: int
    h_p: int
    c_p: int
    tm: int
    tk: int
    resident: bool
    vmem_limit: int


# ---------------------------------------------------------------------------
# Kernel 1: XW1 = x @ W1   (tiny, computed once; bf16 in, bf16 out)
# ---------------------------------------------------------------------------
def _feat_kernel(x_ref, w_ref, out_ref):
    out_ref[...] = jnp.dot(
        x_ref[...], w_ref[...], preferred_element_type=jnp.float32
    ).astype(out_ref.dtype)


# ---------------------------------------------------------------------------
# Kernel 2 (layer 1): HW2 = relu(A @ XW1 + b1) @ W2
#   grid = (row tiles i, K tiles k); f32 VMEM accumulator per row tile.
#   When `resident`, xw_ref holds the full (n_pad, h_p) XW1 in VMEM and the
#   k-slice is taken in-kernel; otherwise xw_ref is the streamed (tk, h_p)
#   tile.  H never touches HBM; only the small bf16 HW2 [n_pad, c_p] goes out.
# ---------------------------------------------------------------------------
def _layer1_kernel(a_ref, xw_ref, b1_ref, w2_ref, hw2_ref, acc_ref,
                   *, tk, resident):
    k = pl.program_id(1)

    @pl.when(k == 0)
    def _():
        acc_ref[...] = jnp.zeros_like(acc_ref)

    if resident:
        off = pl.multiple_of(k * tk, tk)
        xw = xw_ref[pl.ds(off, tk), :]
    else:
        xw = xw_ref[...]
    acc_ref[...] += jnp.dot(a_ref[...], xw, preferred_element_type=jnp.float32)

    @pl.when(k == pl.num_programs(1) - 1)
    def _():
        h = jnp.maximum(acc_ref[...] + b1_ref[...], 0.0)
        hw2_ref[...] = jnp.dot(
            h.astype(jnp.bfloat16), w2_ref[...],
            preferred_element_type=jnp.float32,
        ).astype(hw2_ref.dtype)


# ---------------------------------------------------------------------------
# Kernel 3 (layer 2): out = log_softmax(A @ HW2 + b2) over the class lanes.
#   Padded class lanes carry a -1e30 bias -> exp underflows to 0 exactly.
# ---------------------------------------------------------------------------
def _layer2_kernel(a_ref, hw2_ref, b2_ref, out_ref, acc_ref, *, tk, resident):
    k = pl.program_id(1)

    @pl.when(k == 0)
    def _():
        acc_ref[...] = jnp.zeros_like(acc_ref)

    if resident:
        off = pl.multiple_of(k * tk, tk)
        hw2 = hw2_ref[pl.ds(off, tk), :]
    else:
        hw2 = hw2_ref[...]
    acc_ref[...] += jnp.dot(a_ref[...], hw2, preferred_element_type=jnp.float32)

    @pl.when(k == pl.num_programs(1) - 1)
    def _():
        y = acc_ref[...] + b2_ref[...]
        m = jnp.max(y, axis=1, keepdims=True)
        z = y - m
        lse = jnp.log(jnp.sum(jnp.exp(z), axis=1, keepdims=True))
        out_ref[...] = (z - lse).astype(out_ref.dtype)


# ---------------------------------------------------------------------------
# Tile / residency plan.
# ---------------------------------------------------------------------------
def _make_plan(N, f_in, hidden, n_classes):
    f_in_p = _round_up(f_in, _LANE)
    h_p = _round_up(hidden, _LANE)
    c_p = _round_up(n_classes, _LANE)

    # Padding granularity: small for small graphs (A padding is quadratic),
    # 512 for large graphs so 512/1024/2048 tiles divide n_pad and the
    # ~0.35 us/grid-step overhead is amortized.
    gran = 512 if N > 1024 else 128
    n_pad = _round_up(N, gran)

    # Row tile: biggest power-of-two divisor of n_pad keeping grid_m >= 2
    # (both v7x TensorCores get work on the "parallel" row axis).
    tm = 128
    for t in (1024, 512, 256, 128):
        if n_pad % t == 0 and n_pad // t >= 2:
            tm = t
            break

    # K tile for the streamed A operand: biggest power-of-two divisor.
    tk = 128
    for t in (2048, 1024, 512, 256, 128):
        if n_pad % t == 0:
            tk = t
            break

    vmem_cap = _vmem_capacity_bytes()
    vmem_budget = min(max(vmem_cap // 2, 32 * 1024 * 1024), 96 * 1024 * 1024)
    usable = int(vmem_budget * 0.8)  # headroom for compiler scratch

    side = max(h_p, c_p)

    def footprint(tm_, tk_, resident_):
        a = 2 * tm_ * tk_ * 2                      # A tiles, double-buffered bf16
        if resident_:
            stream = 2 * n_pad * side * 2          # resident XW1 / HW2 (bf16)
        else:
            stream = 2 * tk_ * side * 2            # streamed XW1 / HW2 tile
        w2 = 2 * h_p * c_p * 2                     # resident W2 (bf16)
        acc = tm_ * side * 4                       # f32 accumulator scratch
        out = 2 * tm_ * c_p * 4                    # output tiles (worst case f32)
        return a + stream + w2 + acc + out + (1 << 16)

    resident = footprint(tm, tk, True) <= usable
    # Huge-graph fallback: streamed XW1/HW2; shrink tiles if even that is big.
    while (not resident) and footprint(tm, tk, False) > usable and tk > 256:
        tk //= 2
    while (not resident) and footprint(tm, tk, False) > usable and tm > 256:
        tm //= 2

    return _Plan(n=N, n_classes=n_classes, n_pad=n_pad, f_in_p=f_in_p,
                 h_p=h_p, c_p=c_p, tm=tm, tk=tk, resident=resident,
                 vmem_limit=int(vmem_budget))


# ---------------------------------------------------------------------------
# One-time operand preparation (pad + bf16 cast).  Cache for static graphs.
# ---------------------------------------------------------------------------
def prepare_gcn(x, A, w1, b1, w2, b2):
    N, f_in = x.shape
    hidden = w1.shape[1]
    n_classes = w2.shape[1]
    plan = _make_plan(N, f_in, hidden, n_classes)
    n_pad, f_in_p, h_p, c_p = plan.n_pad, plan.f_in_p, plan.h_p, plan.c_p

    b1 = jnp.asarray(b1).reshape(1, -1)
    b2 = jnp.asarray(b2).reshape(1, -1)

    # bf16 matmul operands (casts hoisted out of the kernels); f32 biases.
    x_p = jnp.zeros((n_pad, f_in_p), jnp.bfloat16).at[:N, :f_in].set(
        x.astype(jnp.bfloat16))
    A_p = jnp.zeros((n_pad, n_pad), jnp.bfloat16).at[:N, :N].set(
        A.astype(jnp.bfloat16))
    w1_p = jnp.zeros((f_in_p, h_p), jnp.bfloat16).at[:f_in, :hidden].set(
        w1.astype(jnp.bfloat16))
    b1_p = jnp.zeros((1, h_p), jnp.float32).at[:, :hidden].set(b1)
    w2_p = jnp.zeros((h_p, c_p), jnp.bfloat16).at[:hidden, :n_classes].set(
        w2.astype(jnp.bfloat16))
    # Padded class lanes get a huge negative bias so log_softmax ignores them.
    b2_p = jnp.full((1, c_p), -1e30, jnp.float32).at[:, :n_classes].set(b2)

    return (x_p, A_p, w1_p, b1_p, w2_p, b2_p), plan


# ---------------------------------------------------------------------------
# Forward on prepared (padded, cast) operands.  `plan` is static.
# ---------------------------------------------------------------------------
def gcn_forward_prepared(x_p, A_p, w1_p, b1_p, w2_p, b2_p, *, plan):
    n_pad, f_in_p, h_p, c_p = plan.n_pad, plan.f_in_p, plan.h_p, plan.c_p
    tm, tk, resident = plan.tm, plan.tk, plan.resident
    grid_m = n_pad // tm
    grid_k = n_pad // tk

    # ---- XW1 = x @ W1 (computed once, bf16 output) ----
    xw1 = pl.pallas_call(
        _feat_kernel,
        out_shape=jax.ShapeDtypeStruct((n_pad, h_p), jnp.bfloat16),
        grid_spec=pltpu.PrefetchScalarGridSpec(
            num_scalar_prefetch=0,
            grid=(grid_m,),
            in_specs=[
                pl.BlockSpec((tm, f_in_p), lambda i: (i, 0)),
                pl.BlockSpec((f_in_p, h_p), lambda i: (0, 0)),
            ],
            out_specs=pl.BlockSpec((tm, h_p), lambda i: (i, 0)),
        ),
        compiler_params=pltpu.CompilerParams(
            dimension_semantics=("parallel",),
            vmem_limit_bytes=plan.vmem_limit),
        cost_estimate=pl.CostEstimate(
            flops=2 * n_pad * f_in_p * h_p,
            transcendentals=0,
            bytes_accessed=(n_pad * f_in_p + f_in_p * h_p + n_pad * h_p) * 2,
        ),
    )(x_p, w1_p)

    if resident:
        # XW1 / HW2 live fully in VMEM (constant block index -> single DMA).
        xw_spec = pl.BlockSpec((n_pad, h_p), lambda i, k: (0, 0))
        hw_spec = pl.BlockSpec((n_pad, c_p), lambda i, k: (0, 0))
        xw_bytes = n_pad * h_p * 2
        hw_bytes = n_pad * c_p * 2
    else:
        # Streamed fallback (very large graphs): re-fetched per row tile.
        xw_spec = pl.BlockSpec((tk, h_p), lambda i, k: (k, 0))
        hw_spec = pl.BlockSpec((tk, c_p), lambda i, k: (k, 0))
        xw_bytes = grid_m * n_pad * h_p * 2
        hw_bytes = grid_m * n_pad * c_p * 2

    # ---- Layer 1 (fused with H @ W2): HW2 = relu(A @ XW1 + b1) @ W2 ----
    hw2 = pl.pallas_call(
        functools.partial(_layer1_kernel, tk=tk, resident=resident),
        out_shape=jax.ShapeDtypeStruct((n_pad, c_p), jnp.bfloat16),
        grid_spec=pltpu.PrefetchScalarGridSpec(
            num_scalar_prefetch=0,
            grid=(grid_m, grid_k),
            in_specs=[
                pl.BlockSpec((tm, tk), lambda i, k: (i, k)),      # A (bf16)
                xw_spec,                                          # XW1 (bf16)
                pl.BlockSpec((1, h_p), lambda i, k: (0, 0)),      # b1 (f32)
                pl.BlockSpec((h_p, c_p), lambda i, k: (0, 0)),    # W2 (bf16)
            ],
            out_specs=pl.BlockSpec((tm, c_p), lambda i, k: (i, 0)),
            scratch_shapes=[pltpu.VMEM((tm, h_p), jnp.float32)],
        ),
        compiler_params=pltpu.CompilerParams(
            dimension_semantics=("parallel", "arbitrary"),
            vmem_limit_bytes=plan.vmem_limit),
        cost_estimate=pl.CostEstimate(
            flops=2 * n_pad * n_pad * h_p + 2 * n_pad * h_p * c_p,
            transcendentals=0,
            bytes_accessed=n_pad * n_pad * 2 + xw_bytes
            + h_p * c_p * 2 + h_p * 4 + n_pad * c_p * 2,
        ),
    )(A_p, xw1, b1_p, w2_p)

    # ---- Layer 2: out = log_softmax(A @ HW2 + b2) ----
    out_p = pl.pallas_call(
        functools.partial(_layer2_kernel, tk=tk, resident=resident),
        out_shape=jax.ShapeDtypeStruct((n_pad, c_p), jnp.float32),
        grid_spec=pltpu.PrefetchScalarGridSpec(
            num_scalar_prefetch=0,
            grid=(grid_m, grid_k),
            in_specs=[
                pl.BlockSpec((tm, tk), lambda i, k: (i, k)),      # A (bf16)
                hw_spec,                                          # HW2 (bf16)
                pl.BlockSpec((1, c_p), lambda i, k: (0, 0)),      # b2 (f32)
            ],
            out_specs=pl.BlockSpec((tm, c_p), lambda i, k: (i, 0)),
            scratch_shapes=[pltpu.VMEM((tm, c_p), jnp.float32)],
        ),
        compiler_params=pltpu.CompilerParams(
            dimension_semantics=("parallel", "arbitrary"),
            vmem_limit_bytes=plan.vmem_limit),
        cost_estimate=pl.CostEstimate(
            flops=2 * n_pad * n_pad * c_p,
            transcendentals=n_pad * c_p,
            bytes_accessed=n_pad * n_pad * 2 + hw_bytes
            + c_p * 4 + n_pad * c_p * 4,
        ),
    )(A_p, hw2, b2_p)

    return out_p


def gcn_forward(x, A, w1, b1, w2, b2):
    """Convenience one-shot forward (prepare + run + unpad)."""
    ops, plan = prepare_gcn(x, A, w1, b1, w2, b2)
    out_p = gcn_forward_prepared(*ops, plan=plan)
    return out_p[:plan.n, :plan.n_classes]


if __name__ == "__main__":
    # Small shapes consistent with the module: N nodes, input_size features,
    # hidden_size hidden, n_classes outputs.
    N, input_size, hidden_size, n_classes = 8, 16, 32, 4

    key = jax.random.PRNGKey(0)
    k_x, k_a, k_w1, k_b1, k_w2, k_b2 = jax.random.split(key, 6)

    x = jax.random.normal(k_x, (N, input_size), dtype=jnp.float32)

    # Symmetric normalized-ish adjacency with self-loops (deterministic).
    A_raw = (jax.random.uniform(k_a, (N, N)) > 0.6).astype(jnp.float32)
    A_raw = jnp.maximum(A_raw, A_raw.T) + jnp.eye(N, dtype=jnp.float32)
    deg = jnp.sum(A_raw, axis=1, keepdims=True)
    A = A_raw / deg

    # Deterministic parameter init (synthetic weights, not a checkpoint).
    w1 = jax.random.normal(k_w1, (input_size, hidden_size), jnp.float32) * 0.1
    b1 = jax.random.normal(k_b1, (1, hidden_size), jnp.float32) * 0.01
    w2 = jax.random.normal(k_w2, (hidden_size, n_classes), jnp.float32) * 0.1
    b2 = jax.random.normal(k_b2, (1, n_classes), jnp.float32) * 0.01

    # Prepare once (pad + bf16 cast of the static graph / weights), then run
    # the jitted forward on the prepared operands.
    ops, plan = prepare_gcn(x, A, w1, b1, w2, b2)
    fwd = jax.jit(functools.partial(gcn_forward_prepared, plan=plan))
    out_p = fwd(*ops)
    out = out_p[:N, :n_classes]
    jax.block_until_ready(out)

    # Pure-JAX f32 reference of the same semantics.  The kernel streams A and
    # the intermediates as bf16 on the MXU (f32 accumulation), so compare with
    # a bf16-appropriate tolerance.
    h_ref = jnp.maximum(A @ (x @ w1) + b1, 0.0)
    y_ref = A @ (h_ref @ w2) + b2
    ref = jax.nn.log_softmax(y_ref, axis=1)

    assert out.shape == (N, n_classes)
    assert bool(jnp.isfinite(out).all())
    err = float(jnp.max(jnp.abs(out - ref)))
    assert err < 2e-2, f"mismatch vs reference: max abs err = {err}"

    print("KERNEL_OK")
</pallas_src>

<mosaic_0001>
module attributes {stable_mosaic.version = 11 : i64} {
  func.func @_feat_kernel(%arg0: i32, %arg1: memref<128x128xbf16, #tpu.memory_space<vmem>>, %arg2: memref<128x128xbf16, #tpu.memory_space<vmem>>, %arg3: memref<128x128xbf16, #tpu.memory_space<vmem>>) attributes {dimension_semantics = [#tpu.dimension_semantics<parallel>], iteration_bounds = array<i64: 1>, scalar_prefetch = 0 : i64, scratch_operands = 0 : i64, tpu.core_type = #tpu.core_type<tc>, window_params = [{transform_indices = @transform_0, window_bounds = array<i64: 128, 128>}, {pipeline_mode = #tpu.pipeline_mode<synchronous>, transform_indices = @transform_1, window_bounds = array<i64: 128, 128>}, {transform_indices = @transform_2, window_bounds = array<i64: 128, 128>}]} {
    %c0 = arith.constant 0 : index
    %c0_0 = arith.constant 0 : index
    %0 = vector.load %arg1[%c0, %c0_0] : memref<128x128xbf16, #tpu.memory_space<vmem>>, vector<128x128xbf16>
    %c0_1 = arith.constant 0 : index
    %c0_2 = arith.constant 0 : index
    %1 = vector.load %arg2[%c0_1, %c0_2] : memref<128x128xbf16, #tpu.memory_space<vmem>>, vector<128x128xbf16>
    %cst = arith.constant dense<0.000000e+00> : vector<128x128xf32>
    %2 = tpu.matmul %0, %1, %cst {dimension_numbers = #tpu.dot_dimension_numbers<[1], [0], [0], [1], [0, 0, 1, 1], [], []>} : vector<128x128xbf16>, vector<128x128xbf16>, vector<128x128xf32> -> vector<128x128xf32>
    %3 = arith.truncf %2 : vector<128x128xf32> to vector<128x128xbf16>
    %c0_3 = arith.constant 0 : index
    %c0_4 = arith.constant 0 : index
    %4 = vector.load %arg3[%c0_3, %c0_4] : memref<128x128xbf16, #tpu.memory_space<vmem>>, vector<128x128xbf16>
    tpu.vector_store %arg3[%c0_3, %c0_4], %3 {strides = array<i32>} : memref<128x128xbf16, #tpu.memory_space<vmem>>, vector<128x128xbf16>,
    return
  }
  func.func @transform_0(%arg0: i32) -> (i32, i32) {
    %c0_i32 = arith.constant 0 : i32
    %c0_i32_0 = arith.constant 0 : i32
    return %arg0, %c0_i32 : i32, i32
  }
  func.func @transform_1(%arg0: i32) -> (i32, i32) {
    %c0_i32 = arith.constant 0 : i32
    %c0_i32_0 = arith.constant 0 : i32
    %c0_i32_1 = arith.constant 0 : i32
    return %c0_i32, %c0_i32_0 : i32, i32
  }
  func.func @transform_2(%arg0: i32) -> (i32, i32) {
    %c0_i32 = arith.constant 0 : i32
    %c0_i32_0 = arith.constant 0 : i32
    return %arg0, %c0_i32 : i32, i32
  }
}

module attributes {stable_mosaic.version = 11 : i64} {
  func.func @_layer2_kernel(%arg0: i32, %arg1: i32, %arg2: memref<128x128xbf16, #tpu.memory_space<vmem>>, %arg3: memref<128x128xbf16, #tpu.memory_space<vmem>>, %arg4: memref<1x128xf32, #tpu.memory_space<vmem>>, %arg5: memref<128x128xf32, #tpu.memory_space<vmem>>, %arg6: memref<128x128xf32, #tpu.memory_space<vmem>>) attributes {dimension_semantics = [#tpu.dimension_semantics<parallel>, #tpu.dimension_semantics<arbitrary>], iteration_bounds = array<i64: 1, 1>, scalar_prefetch = 0 : i64, scratch_operands = 1 : i64, tpu.core_type = #tpu.core_type<tc>, window_params = [{transform_indices = @transform_0, window_bounds = array<i64: 128, 128>}, {pipeline_mode = #tpu.pipeline_mode<synchronous>, transform_indices = @transform_1, window_bounds = array<i64: 128, 128>}, {pipeline_mode = #tpu.pipeline_mode<synchronous>, transform_indices = @transform_2, window_bounds = array<i64: 1, 128>}, {transform_indices = @transform_3, window_bounds = array<i64: 128, 128>}]} {
    %c0_i32 = arith.constant 0 : i32
    %0 = arith.cmpi eq, %arg1, %c0_i32 : i32
    %1 = arith.extui %0 : i1 to i32
    %c0_i32_0 = arith.constant 0 : i32
    %2 = arith.cmpi ne, %1, %c0_i32_0 : i32
    scf.if %2 {
      %cst_9 = arith.constant 0.000000e+00 : f32
      %15 = vector.broadcast %cst_9 : f32 to vector<128x128xf32>
      %c0_10 = arith.constant 0 : index
      %c0_11 = arith.constant 0 : index
      %16 = vector.load %arg6[%c0_10, %c0_11] : memref<128x128xf32, #tpu.memory_space<vmem>>, vector<128x128xf32>
      tpu.vector_store %arg6[%c0_10, %c0_11], %15 {strides = array<i32>} : memref<128x128xf32, #tpu.memory_space<vmem>>, vector<128x128xf32>,
    } else {
    }
    %c128_i32 = arith.constant 128 : i32
    %3 = arith.muli %arg1, %c128_i32 : i32
    %4 = tpu.assume_multiple %3, 128 : i32
    %5 = arith.index_cast %4 : i32 to index
    %c0 = arith.constant 0 : index
    %6 = vector.load %arg3[%5, %c0] : memref<128x128xbf16, #tpu.memory_space<vmem>>, vector<128x128xbf16>
    %c0_1 = arith.constant 0 : index
    %c0_2 = arith.constant 0 : index
    %7 = vector.load %arg6[%c0_1, %c0_2] : memref<128x128xf32, #tpu.memory_space<vmem>>, vector<128x128xf32>
    %c0_3 = arith.constant 0 : index
    %c0_4 = arith.constant 0 : index
    %8 = vector.load %arg2[%c0_3, %c0_4] : memref<128x128xbf16, #tpu.memory_space<vmem>>, vector<128x128xbf16>
    %cst = arith.constant dense<0.000000e+00> : vector<128x128xf32>
    %9 = tpu.matmul %8, %6, %cst {dimension_numbers = #tpu.dot_dimension_numbers<[1], [0], [0], [1], [0, 0, 1, 1], [], []>} : vector<128x128xbf16>, vector<128x128xbf16>, vector<128x128xf32> -> vector<128x128xf32>
    %10 = arith.addf %7, %9 : vector<128x128xf32>
    %c0_5 = arith.constant 0 : index
    %c0_6 = arith.constant 0 : index
    %11 = vector.load %arg6[%c0_5, %c0_6] : memref<128x128xf32, #tpu.memory_space<vmem>>, vector<128x128xf32>
    tpu.vector_store %arg6[%c0_5, %c0_6], %10 {strides = array<i32>} : memref<128x128xf32, #tpu.memory_space<vmem>>, vector<128x128xf32>,
    %c0_i32_7 = arith.constant 0 : i32
    %12 = arith.cmpi eq, %arg1, %c0_i32_7 : i32
    %13 = arith.extui %12 : i1 to i32
    %c0_i32_8 = arith.constant 0 : i32
    %14 = arith.cmpi ne, %13, %c0_i32_8 : i32
    scf.if %14 {
      %c0_9 = arith.constant 0 : index
      %c0_10 = arith.constant 0 : index
      %15 = vector.load %arg6[%c0_9, %c0_10] : memref<128x128xf32, #tpu.memory_space<vmem>>, vector<128x128xf32>
      %c0_11 = arith.constant 0 : index
      %c0_12 = arith.constant 0 : index
      %16 = vector.load %arg4[%c0_11, %c0_12] : memref<1x128xf32, #tpu.memory_space<vmem>>, vector<1x128xf32>
      %17 = vector.broadcast %16 : vector<1x128xf32> to vector<128x128xf32>
      %18 = arith.addf %15, %17 : vector<128x128xf32>
      %cst_13 = arith.constant dense<0xFF800000> : vector<128xf32>
      %19 = vector.multi_reduction <maximumf>, %18, %cst_13 [1] : vector<128x128xf32> to vector<128xf32>
      %20 = vector.shape_cast %19 : vector<128xf32> to vector<128x1xf32>
      %21 = vector.broadcast %20 : vector<128x1xf32> to vector<128x128xf32>
      %22 = arith.subf %18, %21 : vector<128x128xf32>
      %23 = math.exp %22 : vector<128x128xf32>
      %cst_14 = arith.constant dense<0.000000e+00> : vector<128xf32>
      %24 = vector.multi_reduction <add>, %23, %cst_14 [1] : vector<128x128xf32> to vector<128xf32>
      %25 = vector.shape_cast %24 : vector<128xf32> to vector<128x1xf32>
      %26 = math.log %25 : vector<128x1xf32>
      %27 = vector.broadcast %26 : vector<128x1xf32> to vector<128x128xf32>
      %28 = arith.subf %22, %27 : vector<128x128xf32>
      %c0_15 = arith.constant 0 : index
      %c0_16 = arith.constant 0 : index
      %29 = vector.load %arg5[%c0_15, %c0_16] : memref<128x128xf32, #tpu.memory_space<vmem>>, vector<128x128xf32>
      tpu.vector_store %arg5[%c0_15, %c0_16], %28 {strides = array<i32>} : memref<128x128xf32, #tpu.memory_space<vmem>>, vector<128x128xf32>,
    } else {
    }
    return
  }
  func.func @transform_0(%arg0: i32, %arg1: i32) -> (i32, i32) {
    %c0_i32 = arith.constant 0 : i32
    return %arg0, %arg1 : i32, i32
  }
  func.func @transform_1(%arg0: i32, %arg1: i32) -> (i32, i32) {
    %c0_i32 = arith.constant 0 : i32
    %c0_i32_0 = arith.constant 0 : i32
    %c0_i32_1 = arith.constant 0 : i32
    return %c0_i32, %c0_i32_0 : i32, i32
  }
  func.func @transform_2(%arg0: i32, %arg1: i32) -> (i32, i32) {
    %c0_i32 = arith.constant 0 : i32
    %c0_i32_0 = arith.constant 0 : i32
    %c0_i32_1 = arith.constant 0 : i32
    return %c0_i32, %c0_i32_0 : i32, i32
  }
  func.func @transform_3(%arg0: i32, %arg1: i32) -> (i32, i32) {
    %c0_i32 = arith.constant 0 : i32
    %c0_i32_0 = arith.constant 0 : i32
    return %arg0, %c0_i32 : i32, i32
  }
}

module attributes {stable_mosaic.version = 11 : i64} {
  func.func @_layer1_kernel(%arg0: i32, %arg1: i32, %arg2: memref<128x128xbf16, #tpu.memory_space<vmem>>, %arg3: memref<128x128xbf16, #tpu.memory_space<vmem>>, %arg4: memref<1x128xf32, #tpu.memory_space<vmem>>, %arg5: memref<128x128xbf16, #tpu.memory_space<vmem>>, %arg6: memref<128x128xbf16, #tpu.memory_space<vmem>>, %arg7: memref<128x128xf32, #tpu.memory_space<vmem>>) attributes {dimension_semantics = [#tpu.dimension_semantics<parallel>, #tpu.dimension_semantics<arbitrary>], iteration_bounds = array<i64: 1, 1>, scalar_prefetch = 0 : i64, scratch_operands = 1 : i64, tpu.core_type = #tpu.core_type<tc>, window_params = [{transform_indices = @transform_0, window_bounds = array<i64: 128, 128>}, {pipeline_mode = #tpu.pipeline_mode<synchronous>, transform_indices = @transform_1, window_bounds = array<i64: 128, 128>}, {pipeline_mode = #tpu.pipeline_mode<synchronous>, transform_indices = @transform_2, window_bounds = array<i64: 1, 128>}, {pipeline_mode = #tpu.pipeline_mode<synchronous>, transform_indices = @transform_3, window_bounds = array<i64: 128, 128>}, {transform_indices = @transform_4, window_bounds = array<i64: 128, 128>}]} {
    %c0_i32 = arith.constant 0 : i32
    %0 = arith.cmpi eq, %arg1, %c0_i32 : i32
    %1 = arith.extui %0 : i1 to i32
    %c0_i32_0 = arith.constant 0 : i32
    %2 = arith.cmpi ne, %1, %c0_i32_0 : i32
    scf.if %2 {
      %cst_9 = arith.constant 0.000000e+00 : f32
      %15 = vector.broadcast %cst_9 : f32 to vector<128x128xf32>
      %c0_10 = arith.constant 0 : index
      %c0_11 = arith.constant 0 : index
      %16 = vector.load %arg7[%c0_10, %c0_11] : memref<128x128xf32, #tpu.memory_space<vmem>>, vector<128x128xf32>
      tpu.vector_store %arg7[%c0_10, %c0_11], %15 {strides = array<i32>} : memref<128x128xf32, #tpu.memory_space<vmem>>, vector<128x128xf32>,
    } else {
    }
    %c128_i32 = arith.constant 128 : i32
    %3 = arith.muli %arg1, %c128_i32 : i32
    %4 = tpu.assume_multiple %3, 128 : i32
    %5 = arith.index_cast %4 : i32 to index
    %c0 = arith.constant 0 : index
    %6 = vector.load %arg3[%5, %c0] : memref<128x128xbf16, #tpu.memory_space<vmem>>, vector<128x128xbf16>
    %c0_1 = arith.constant 0 : index
    %c0_2 = arith.constant 0 : index
    %7 = vector.load %arg7[%c0_1, %c0_2] : memref<128x128xf32, #tpu.memory_space<vmem>>, vector<128x128xf32>
    %c0_3 = arith.constant 0 : index
    %c0_4 = arith.constant 0 : index
    %8 = vector.load %arg2[%c0_3, %c0_4] : memref<128x128xbf16, #tpu.memory_space<vmem>>, vector<128x128xbf16>
    %cst = arith.constant dense<0.000000e+00> : vector<128x128xf32>
    %9 = tpu.matmul %8, %6, %cst {dimension_numbers = #tpu.dot_dimension_numbers<[1], [0], [0], [1], [0, 0, 1, 1], [], []>} : vector<128x128xbf16>, vector<128x128xbf16>, vector<128x128xf32> -> vector<128x128xf32>
    %10 = arith.addf %7, %9 : vector<128x128xf32>
    %c0_5 = arith.constant 0 : index
    %c0_6 = arith.constant 0 : index
    %11 = vector.load %arg7[%c0_5, %c0_6] : memref<128x128xf32, #tpu.memory_space<vmem>>, vector<128x128xf32>
    tpu.vector_store %arg7[%c0_5, %c0_6], %10 {strides = array<i32>} : memref<128x128xf32, #tpu.memory_space<vmem>>, vector<128x128xf32>,
    %c0_i32_7 = arith.constant 0 : i32
    %12 = arith.cmpi eq, %arg1, %c0_i32_7 : i32
    %13 = arith.extui %12 : i1 to i32
    %c0_i32_8 = arith.constant 0 : i32
    %14 = arith.cmpi ne, %13, %c0_i32_8 : i32
    scf.if %14 {
      %c0_9 = arith.constant 0 : index
      %c0_10 = arith.constant 0 : index
      %15 = vector.load %arg7[%c0_9, %c0_10] : memref<128x128xf32, #tpu.memory_space<vmem>>, vector<128x128xf32>
      %c0_11 = arith.constant 0 : index
      %c0_12 = arith.constant 0 : index
      %16 = vector.load %arg4[%c0_11, %c0_12] : memref<1x128xf32, #tpu.memory_space<vmem>>, vector<1x128xf32>
      %17 = vector.broadcast %16 : vector<1x128xf32> to vector<128x128xf32>
      %18 = arith.addf %15, %17 : vector<128x128xf32>
      %cst_13 = arith.constant 0.000000e+00 : f32
      %19 = vector.broadcast %cst_13 : f32 to vector<128x128xf32>
      %20 = arith.maximumf %18, %19 : vector<128x128xf32>
      %21 = arith.truncf %20 : vector<128x128xf32> to vector<128x128xbf16>
      %c0_14 = arith.constant 0 : index
      %c0_15 = arith.constant 0 : index
      %22 = vector.load %arg5[%c0_14, %c0_15] : memref<128x128xbf16, #tpu.memory_space<vmem>>, vector<128x128xbf16>
      %cst_16 = arith.constant dense<0.000000e+00> : vector<128x128xf32>
      %23 = tpu.matmul %21, %22, %cst_16 {dimension_numbers = #tpu.dot_dimension_numbers<[1], [0], [0], [1], [0, 0, 1, 1], [], []>} : vector<128x128xbf16>, vector<128x128xbf16>, vector<128x128xf32> -> vector<128x128xf32>
      %24 = arith.truncf %23 : vector<128x128xf32> to vector<128x128xbf16>
      %c0_17 = arith.constant 0 : index
      %c0_18 = arith.constant 0 : index
      %25 = vector.load %arg6[%c0_17, %c0_18] : memref<128x128xbf16, #tpu.memory_space<vmem>>, vector<128x128xbf16>
      tpu.vector_store %arg6[%c0_17, %c0_18], %24 {strides = array<i32>} : memref<128x128xbf16, #tpu.memory_space<vmem>>, vector<128x128xbf16>,
    } else {
    }
    return
  }
  func.func @transform_0(%arg0: i32, %arg1: i32) -> (i32, i32) {
    %c0_i32 = arith.constant 0 : i32
    return %arg0, %arg1 : i32, i32
  }
  func.func @transform_1(%arg0: i32, %arg1: i32) -> (i32, i32) {
    %c0_i32 = arith.constant 0 : i32
    %c0_i32_0 = arith.constant 0 : i32
    %c0_i32_1 = arith.constant 0 : i32
    return %c0_i32, %c0_i32_0 : i32, i32
  }
  func.func @transform_2(%arg0: i32, %arg1: i32) -> (i32, i32) {
    %c0_i32 = arith.constant 0 : i32
    %c0_i32_0 = arith.constant 0 : i32
    %c0_i32_1 = arith.constant 0 : i32
    return %c0_i32, %c0_i32_0 : i32, i32
  }
  func.func @transform_3(%arg0: i32, %arg1: i32) -> (i32, i32) {
    %c0_i32 = arith.constant 0 : i32
    %c0_i32_0 = arith.constant 0 : i32
    %c0_i32_1 = arith.constant 0 : i32
    return %c0_i32, %c0_i32_0 : i32, i32
  }
  func.func @transform_4(%arg0: i32, %arg1: i32) -> (i32, i32) {
    %c0_i32 = arith.constant 0 : i32
    %c0_i32_0 = arith.constant 0 : i32
    return %arg0, %c0_i32 : i32, i32
  }
}

</mosaic_0001>

<llo_original>
// kernel: gcn_forward_prepared.3
$region0: #{gcn_forward_prepared.3}
  #allocation0 [shape = 'u32[]', space=smem, size = 0x4, offset = 0x4, fixed_abs, tag = 'smem constant byte address 0x4 - core index']
  #allocation1 [shape = 'u32[72,128]{1,0:T(1,128)}', space=vmem, size = 0x9000, scoped, tag = 'internal scratch']
  %s0 = inlined_call_operand.hbm [shape: bf16[128,128], index: 0, kind: input, shape index: {}]
  %s1 = inlined_call_operand.hbm [shape: bf16[128,128], index: 1, kind: input, shape index: {}]
  %s2 = inlined_call_operand.vmem [shape: bf16[128,128], index: 2, kind: output, shape index: {}]
  %s3 = sld [smem:[#allocation0]]
  $region26: #{gcn_forward_prepared.3} parent=0
    _
  %s5 = ssub.s32 1, %s3
  %s6 = scalar_select 0, %s5, %s3
  $region1: #{gcn_forward_prepared.3} parent=0
    #allocation2 [shape = 'u8[32768]{0}', space=vmem, size = 0x8000, scoped, tag = 'input window, operand 0, single buffered']
    #allocation3 [shape = 's32[1]{0}', space=sflag, size = 0x4, scoped, tag = 'scoped memory for gcn_forward_prepared.3']
    #allocation4 [shape = 'u8[32768]{0}', space=vmem, size = 0x8000, scoped, tag = 'input window, operand 1, single buffered']
    #allocation5 [shape = 's32[1]{0}', space=sflag, size = 0x4, scoped, tag = 'scoped memory for gcn_forward_prepared.3']
    %7 = vsyncpa [#allocation3], 0
    %8 = vsyncpa [#allocation5], 0
    // Predicated region
    $region2: #{gcn_forward_prepared.3} parent=1 // pred_check
      _
    $region3: #{gcn_forward_prepared.3} parent=1 // pred_check_branch
      %10 = sbr.rel (0) target = $region5
    $region4: #{gcn_forward_prepared.3} parent=1 // pred_region
      %12 = vsyncadd [#allocation3], 0
      %s13 = sshll.u32 %s0, 4
      %s14 = int_to_ptr.hbm [resolvable:$true] %s13
      %s15 = sshll.u32 [#allocation2], 4
      %s16 = int_to_ptr.vmem [resolvable:$true] %s15
      %21 = dma.hbm_to_vmem [thread:$0]  %s14, 1024, %s16, [#allocation3], 64, 64, 4
    $region5: #{gcn_forward_prepared.3} parent=1 // pred_fallthru
      _
    // Predicated region
    $region6: #{gcn_forward_prepared.3} parent=1 // pred_check
      _
    $region7: #{gcn_forward_prepared.3} parent=1 // pred_check_branch
      %23 = sbr.rel (0) target = $region9
    $region8: #{gcn_forward_prepared.3} parent=1 // pred_region
      %25 = vsyncadd [#allocation5], 0
      %s26 = sshll.u32 %s1, 4
      %s27 = int_to_ptr.hbm [resolvable:$true] %s26
      %s28 = sshll.u32 [#allocation4], 4
      %s29 = int_to_ptr.vmem [resolvable:$true] %s28
      %34 = dma.hbm_to_vmem [thread:$0]  %s27, 1024, %s29, [#allocation5], 64, 64, 4
    $region9: #{gcn_forward_prepared.3} parent=1 // pred_fallthru
      _
    // Predicated region
    $region10: #{gcn_forward_prepared.3} parent=1 // pred_check
      _
    $region11: #{gcn_forward_prepared.3} parent=1 // pred_check_branch
      %36 = sbr.rel (0) target = $region13
    $region12: #{gcn_forward_prepared.3} parent=1 // pred_region
      %38 = dma.done [#allocation3], 1024
    $region13: #{gcn_forward_prepared.3} parent=1 // pred_fallthru
      _
    // Predicated region
    $region14: #{gcn_forward_prepared.3} parent=1 // pred_check
      _
    $region15: #{gcn_forward_prepared.3} parent=1 // pred_check_branch
      %40 = sbr.rel (0) target = $region17
    $region16: #{gcn_forward_prepared.3} parent=1 // pred_region
      %42 = dma.done [#allocation5], 1024
    $region17: #{gcn_forward_prepared.3} parent=1 // pred_fallthru
      _
    %v43 = vld [vmem:[#allocation2] sm:$0xf]
    %v44 = vld [vmem:[#allocation2 + $0x4] sm:$0xf]
    %v45 = vld [vmem:[#allocation2 + $0x8] sm:$0xf]
    %v46 = vld [vmem:[#allocation2 + $0xc] sm:$0xf]
    %v47 = vld [vmem:[#allocation2 + $0x10] sm:$0xf]
    %v48 = vld [vmem:[#allocation2 + $0x14] sm:$0xf]
    %v49 = vld [vmem:[#allocation2 + $0x18] sm:$0xf]
    %v50 = vld [vmem:[#allocation2 + $0x1c] sm:$0xf]
    %v51 = vld [vmem:[#allocation2 + $0x20] sm:$0xf]
    %v52 = vld [vmem:[#allocation2 + $0x24] sm:$0xf]
    %v53 = vld [vmem:[#allocation2 + $0x28] sm:$0xf]
    %v54 = vld [vmem:[#allocation2 + $0x2c] sm:$0xf]
    %v55 = vld [vmem:[#allocation2 + $0x30] sm:$0xf]
    %v56 = vld [vmem:[#allocation2 + $0x34] sm:$0xf]
    %v57 = vld [vmem:[#allocation2 + $0x38] sm:$0xf]
    %v58 = vld [vmem:[#allocation2 + $0x3c] sm:$0xf]
    %v59 = vld [vmem:[#allocation4] sm:$0xf]
    %v60 = vld [vmem:[#allocation4 + $0x4] sm:$0xf]
    %v61 = vld [vmem:[#allocation4 + $0x8] sm:$0xf]
    %v62 = vld [vmem:[#allocation4 + $0xc] sm:$0xf]
    %v63 = vld [vmem:[#allocation4 + $0x10] sm:$0xf]
    %v64 = vld [vmem:[#allocation4 + $0x14] sm:$0xf]
    %v65 = vld [vmem:[#allocation4 + $0x18] sm:$0xf]
    %v66 = vld [vmem:[#allocation4 + $0x1c] sm:$0xf]
    %v67 = vld [vmem:[#allocation4 + $0x20] sm:$0xf]
    %v68 = vld [vmem:[#allocation4 + $0x24] sm:$0xf]
    %v69 = vld [vmem:[#allocation4 + $0x28] sm:$0xf]
    %v70 = vld [vmem:[#allocation4 + $0x2c] sm:$0xf]
    %v71 = vld [vmem:[#allocation4 + $0x30] sm:$0xf]
    %v72 = vld [vmem:[#allocation4 + $0x34] sm:$0xf]
    %v73 = vld [vmem:[#allocation4 + $0x38] sm:$0xf]
    %v74 = vld [vmem:[#allocation4 + $0x3c] sm:$0xf]
    %v91 = vunpack.c.l.b16 %v43
    %v92 = vunpack.c.l.b16 %v44
    %v93 = vunpack.c.l.b16 %v45
    %v94 = vunpack.c.l.b16 %v46
    %v95 = vunpack.c.l.b16 %v47
    %v96 = vunpack.c.l.b16 %v48
    %v97 = vunpack.c.l.b16 %v49
    %v98 = vunpack.c.l.b16 %v50
    %v99 = vunpack.c.l.b16 %v51
    %v100 = vunpack.c.l.b16 %v52
    %v101 = vunpack.c.l.b16 %v53
    %v102 = vunpack.c.l.b16 %v54
    %v103 = vunpack.c.l.b16 %v55
    %v104 = vunpack.c.l.b16 %v56
    %v105 = vunpack.c.l.b16 %v57
    %v106 = vunpack.c.l.b16 %v58
    %v107 = vpack.c.b16 %v92, %v91
    %v108 = vpack.c.b16 %v94, %v93
    %v109 = vpack.c.b16 %v96, %v95
    %v110 = vpack.c.b16 %v98, %v97
    %v111 = vpack.c.b16 %v100, %v99
    %v112 = vpack.c.b16 %v102, %v101
    %v113 = vpack.c.b16 %v104, %v103
    %v114 = vpack.c.b16 %v106, %v105
    %v139 = vunpack.c.l.b16 %v59
    %v140 = vunpack.c.l.b16 %v60
    %v141 = vunpack.c.l.b16 %v61
    %v142 = vunpack.c.l.b16 %v62
    %v143 = vunpack.c.l.b16 %v63
    %v144 = vunpack.c.l.b16 %v64
    %v145 = vunpack.c.l.b16 %v65
    %v146 = vunpack.c.l.b16 %v66
    %v147 = vunpack.c.l.b16 %v67
    %v148 = vunpack.c.l.b16 %v68
    %v149 = vunpack.c.l.b16 %v69
    %v150 = vunpack.c.l.b16 %v70
    %v151 = vunpack.c.l.b16 %v71
    %v152 = vunpack.c.l.b16 %v72
    %v153 = vunpack.c.l.b16 %v73
    %v154 = vunpack.c.l.b16 %v74
    %v155 = vpack.c.b16 %v140, %v139
    %v156 = vpack.c.b16 %v142, %v141
    %v157 = vpack.c.b16 %v144, %v143
    %v158 = vpack.c.b16 %v146, %v145
    %v159 = vpack.c.b16 %v148, %v147
    %v160 = vpack.c.b16 %v150, %v149
    %v161 = vpack.c.b16 %v152, %v151
    %v162 = vpack.c.b16 %v154, %v153
    %171 = vmatpush.bf16.msra.mxu0 %v162
    %172 = vmatpush.bf16.msra.mxu0 %v161
    %173 = vmatpush.bf16.msra.mxu0 %v160
    %174 = vmatpush.bf16.msra.mxu0 %v159
    %175 = vmatpush.bf16.msra.mxu0 %v158
    %176 = vmatpush.bf16.msra.mxu0 %v157
    %177 = vmatpush.bf16.msra.mxu0 %v156
    %178 = vmatpush.bf16.msra.mxu0 %v155
    %179 = vmatmul.bf16.gmra.mxu0 %v107
    %v180 = vpop.f32.mrf.mxu0
    %v181 = vadd.f32 0.0, %v180
    %v182 = vpop.f32.mrf.mxu0
    %v183 = vadd.f32 0.0, %v182
    %184 = vmatmul.bf16.gmra.mxu0 %v108
    %v185 = vpop.f32.mrf.mxu0
    %v186 = vadd.f32 0.0, %v185
    %v187 = vpop.f32.mrf.mxu0
    %v188 = vadd.f32 0.0, %v187
    %189 = vmatmul.bf16.gmra.mxu0 %v109
    %v190 = vpop.f32.mrf.mxu0
    %v191 = vadd.f32 0.0, %v190
    %v192 = vpop.f32.mrf.mxu0
    %v193 = vadd.f32 0.0, %v192
    %194 = vmatmul.bf16.gmra.mxu0 %v110
    %v195 = vpop.f32.mrf.mxu0
    %v196 = vadd.f32 0.0, %v195
    %v197 = vpop.f32.mrf.mxu0
    %v198 = vadd.f32 0.0, %v197
    %199 = vmatmul.bf16.gmra.mxu0 %v111
    %v200 = vpop.f32.mrf.mxu0
    %v201 = vadd.f32 0.0, %v200
    %v202 = vpop.f32.mrf.mxu0
    %v203 = vadd.f32 0.0, %v202
    %204 = vmatmul.bf16.gmra.mxu0 %v112
    %v205 = vpop.f32.mrf.mxu0
    %v206 = vadd.f32 0.0, %v205
    %v207 = vpop.f32.mrf.mxu0
    %v208 = vadd.f32 0.0, %v207
    %209 = vmatmul.bf16.gmra.mxu0 %v113
    %v210 = vpop.f32.mrf.mxu0
    %v211 = vadd.f32 0.0, %v210
    %v212 = vpop.f32.mrf.mxu0
    %v213 = vadd.f32 0.0, %v212
    %214 = vmatmul.bf16.gmra.mxu0 %v114
    %v215 = vpop.f32.mrf.mxu0
    %v216 = vadd.f32 0.0, %v215
    %v217 = vpop.f32.mrf.mxu0
    %v218 = vadd.f32 0.0, %v217
    %219 = vdwg.mxu0
    %v220 = vpack.c.bf16 %v181, %v181
    %v221 = vpack.c.bf16 %v183, %v183
    %v222 = vpack.c.bf16 %v186, %v186
    %v223 = vpack.c.bf16 %v188, %v188
    %v224 = vpack.c.bf16 %v191, %v191
    %v225 = vpack.c.bf16 %v193, %v193
    %v226 = vpack.c.bf16 %v196, %v196
    %v227 = vpack.c.bf16 %v198, %v198
    %v228 = vpack.c.bf16 %v201, %v201
    %v229 = vpack.c.bf16 %v203, %v203
    %v230 = vpack.c.bf16 %v206, %v206
    %v231 = vpack.c.bf16 %v208, %v208
    %v232 = vpack.c.bf16 %v211, %v211
    %v233 = vpack.c.bf16 %v213, %v213
    %v234 = vpack.c.bf16 %v216, %v216
    %v235 = vpack.c.bf16 %v218, %v218
    %236 = vst [vmem:[%s2] sm:$0xf] %v220
    %237 = vst [vmem:[%s2 + $0x4] sm:$0xf] %v221
    %238 = vst [vmem:[%s2 + $0x8] sm:$0xf] %v222
    %239 = vst [vmem:[%s2 + $0xc] sm:$0xf] %v223
    %240 = vst [vmem:[%s2 + $0x10] sm:$0xf] %v224
    %241 = vst [vmem:[%s2 + $0x14] sm:$0xf] %v225
    %242 = vst [vmem:[%s2 + $0x18] sm:$0xf] %v226
    %243 = vst [vmem:[%s2 + $0x1c] sm:$0xf] %v227
    %244 = vst [vmem:[%s2 + $0x20] sm:$0xf] %v228
    %245 = vst [vmem:[%s2 + $0x24] sm:$0xf] %v229
    %246 = vst [vmem:[%s2 + $0x28] sm:$0xf] %v230
    %247 = vst [vmem:[%s2 + $0x2c] sm:$0xf] %v231
    %248 = vst [vmem:[%s2 + $0x30] sm:$0xf] %v232
    %249 = vst [vmem:[%s2 + $0x34] sm:$0xf] %v233
    %250 = vst [vmem:[%s2 + $0x38] sm:$0xf] %v234
    %251 = vst [vmem:[%s2 + $0x3c] sm:$0xf] %v235
    // Predicated region
    $region18: #{gcn_forward_prepared.3} parent=1 // pred_check
      _
    $region19: #{gcn_forward_prepared.3} parent=1 // pred_check_branch
      %253 = sbr.rel (0) target = $region21
    $region20: #{gcn_forward_prepared.3} parent=1 // pred_region
      _
    $region21: #{gcn_forward_prepared.3} parent=1 // pred_fallthru
      _
    // Predicated region
    $region22: #{gcn_forward_prepared.3} parent=1 // pred_check
      _
    $region23: #{gcn_forward_prepared.3} parent=1 // pred_check_branch
      %255 = sbr.rel (0) target = $region25
    $region24: #{gcn_forward_prepared.3} parent=1 // pred_region
      _
    $region25: #{gcn_forward_prepared.3} parent=1 // pred_fallthru
      _
    %256 = vsyncpa [#allocation3], 1
    %257 = vsyncpa [#allocation5], 1

// kernel: gcn_forward_prepared.5
$region0: #{gcn_forward_prepared.5}
  #allocation0 [shape = 'u32[]', space=smem, size = 0x4, offset = 0x4, fixed_abs, tag = 'smem constant byte address 0x4 - core index']
  #allocation1 [shape = 'u32[72,128]{1,0:T(1,128)}', space=vmem, size = 0x9000, scoped, tag = 'internal scratch']
  #allocation2 [shape = 'f32[128,128]{1,0:T(8,128)}', space=vmem, size = 0x10000, scoped, tag = 'scratch operand']
  %s0 = inlined_call_operand.vmem [shape: bf16[128,128], index: 0, kind: input, shape index: {}]
  %s1 = inlined_call_operand.vmem [shape: bf16[128,128], index: 1, kind: input, shape index: {}]
  %s2 = inlined_call_operand.vmem [shape: f32[1,128], index: 2, kind: input, shape index: {}]
  %s3 = inlined_call_operand.hbm [shape: f32[128,128], index: 3, kind: output, shape index: {}]
  %s4 = sld [smem:[#allocation0]]
  $region30: #{gcn_forward_prepared.5} parent=0
    _
  %s6 = ssub.s32 1, %s4
  %s7 = scalar_select 0, %s6, %s4
  $region1: #{gcn_forward_prepared.5} parent=0
    #allocation3 [shape = 'u8[65536]{0}', space=vmem, size = 0x10000, scoped, tag = 'output window, operand 0, single buffered']
    #allocation4 [shape = 's32[1]{0}', space=sflag, size = 0x4, scoped, tag = 'scoped memory for gcn_forward_prepared.5']
    %8 = vsyncpa [#allocation4], 0
    // Predicated region
    $region2: #{gcn_forward_prepared.5} parent=1 // pred_check
      _
    $region3: #{gcn_forward_prepared.5} parent=1 // pred_check_branch
      %10 = sbr.rel (0) target = $region5
    $region4: #{gcn_forward_prepared.5} parent=1 // pred_region
      _
    $region5: #{gcn_forward_prepared.5} parent=1 // pred_fallthru
      _
    // Predicated region
    $region6: #{gcn_forward_prepared.5} parent=1 // pred_check
      _
    $region7: #{gcn_forward_prepared.5} parent=1 // pred_check_branch
      %12 = sbr.rel (0) target = $region9
    $region8: #{gcn_forward_prepared.5} parent=1 // pred_region
      _
    $region9: #{gcn_forward_prepared.5} parent=1 // pred_fallthru
      _
    // Predicated region
    $region10: #{gcn_forward_prepared.5} parent=1 // pred_check
      _
    $region11: #{gcn_forward_prepared.5} parent=1 // pred_check_branch
      %14 = sbr.rel (0) target = $region13
    $region12: #{gcn_forward_prepared.5} parent=1 // pred_region
      _
    $region13: #{gcn_forward_prepared.5} parent=1 // pred_fallthru
      _
    %p15 = scmp.eq.s32.totalorder 0, 0
    // Predicated region
    $region14: #{gcn_forward_prepared.5} parent=1 // pred_check
      %p16 = pneg %p15
    $region15: #{gcn_forward_prepared.5} parent=1 // pred_check_branch
      %18 = sbr.rel (%p16) target = $region17
    $region16: #{gcn_forward_prepared.5} parent=1 // pred_region
      %19 = vst [vmem:[#allocation2] sm:$0xff] 0.0
      %20 = vst [vmem:[#allocation2 + $0x8] sm:$0xff] 0.0
      %21 = vst [vmem:[#allocation2 + $0x10] sm:$0xff] 0.0
      %22 = vst [vmem:[#allocation2 + $0x18] sm:$0xff] 0.0
      %23 = vst [vmem:[#allocation2 + $0x20] sm:$0xff] 0.0
      %24 = vst [vmem:[#allocation2 + $0x28] sm:$0xff] 0.0
      %25 = vst [vmem:[#allocation2 + $0x30] sm:$0xff] 0.0
      %26 = vst [vmem:[#allocation2 + $0x38] sm:$0xff] 0.0
      %27 = vst [vmem:[#allocation2 + $0x40] sm:$0xff] 0.0
      %28 = vst [vmem:[#allocation2 + $0x48] sm:$0xff] 0.0
      %29 = vst [vmem:[#allocation2 + $0x50] sm:$0xff] 0.0
      %30 = vst [vmem:[#allocation2 + $0x58] sm:$0xff] 0.0
      %31 = vst [vmem:[#allocation2 + $0x60] sm:$0xff] 0.0
      %32 = vst [vmem:[#allocation2 + $0x68] sm:$0xff] 0.0
      %33 = vst [vmem:[#allocation2 + $0x70] sm:$0xff] 0.0
      %34 = vst [vmem:[#allocation2 + $0x78] sm:$0xff] 0.0
    $region17: #{gcn_forward_prepared.5} parent=1 // pred_fallthru
      _
    %s35 = smul.u32 0, 128
    %s36 = sshra.s32 %s35, 3
    %s37 = sand.u32 %s35, 7
    %s38 = smul.addr %s36, 4
    %s39 = scalar_lea.vmem %s1, %s38
    %v40 = vld [vmem:[%s39] sm:$0xf]
    %v41 = vld [vmem:[%s39 + $0x4] sm:$0xf]
    %v42 = vld [vmem:[%s39 + $0x8] sm:$0xf]
    %v43 = vld [vmem:[%s39 + $0xc] sm:$0xf]
    %v44 = vld [vmem:[%s39 + $0x10] sm:$0xf]
    %v45 = vld [vmem:[%s39 + $0x14] sm:$0xf]
    %v46 = vld [vmem:[%s39 + $0x18] sm:$0xf]
    %v47 = vld [vmem:[%s39 + $0x1c] sm:$0xf]
    %v48 = vld [vmem:[%s39 + $0x20] sm:$0xf]
    %v49 = vld [vmem:[%s39 + $0x24] sm:$0xf]
    %v50 = vld [vmem:[%s39 + $0x28] sm:$0xf]
    %v51 = vld [vmem:[%s39 + $0x2c] sm:$0xf]
    %v52 = vld [vmem:[%s39 + $0x30] sm:$0xf]
    %v53 = vld [vmem:[%s39 + $0x34] sm:$0xf]
    %v54 = vld [vmem:[%s39 + $0x38] sm:$0xf]
    %v55 = vld [vmem:[%s39 + $0x3c] sm:$0xf]
    %v56 = vld [vmem:[#allocation2] sm:$0xff]
    %v57 = vld [vmem:[#allocation2 + $0x8] sm:$0xff]
    %v58 = vld [vmem:[#allocation2 + $0x10] sm:$0xff]
    %v59 = vld [vmem:[#allocation2 + $0x18] sm:$0xff]
    %v60 = vld [vmem:[#allocation2 + $0x20] sm:$0xff]
    %v61 = vld [vmem:[#allocation2 + $0x28] sm:$0xff]
    %v62 = vld [vmem:[#allocation2 + $0x30] sm:$0xff]
    %v63 = vld [vmem:[#allocation2 + $0x38] sm:$0xff]
    %v64 = vld [vmem:[#allocation2 + $0x40] sm:$0xff]
    %v65 = vld [vmem:[#allocation2 + $0x48] sm:$0xff]
    %v66 = vld [vmem:[#allocation2 + $0x50] sm:$0xff]
    %v67 = vld [vmem:[#allocation2 + $0x58] sm:$0xff]
    %v68 = vld [vmem:[#allocation2 + $0x60] sm:$0xff]
    %v69 = vld [vmem:[#allocation2 + $0x68] sm:$0xff]
    %v70 = vld [vmem:[#allocation2 + $0x70] sm:$0xff]
    %v71 = vld [vmem:[#allocation2 + $0x78] sm:$0xff]
    %v72 = vld [vmem:[%s0] sm:$0xf]
    %v73 = vld [vmem:[%s0 + $0x4] sm:$0xf]
    %v74 = vld [vmem:[%s0 + $0x8] sm:$0xf]
    %v75 = vld [vmem:[%s0 + $0xc] sm:$0xf]
    %v76 = vld [vmem:[%s0 + $0x10] sm:$0xf]
    %v77 = vld [vmem:[%s0 + $0x14] sm:$0xf]
    %v78 = vld [vmem:[%s0 + $0x18] sm:$0xf]
    %v79 = vld [vmem:[%s0 + $0x1c] sm:$0xf]
    %v80 = vld [vmem:[%s0 + $0x20] sm:$0xf]
    %v81 = vld [vmem:[%s0 + $0x24] sm:$0xf]
    %v82 = vld [vmem:[%s0 + $0x28] sm:$0xf]
    %v83 = vld [vmem:[%s0 + $0x2c] sm:$0xf]
    %v84 = vld [vmem:[%s0 + $0x30] sm:$0xf]
    %v85 = vld [vmem:[%s0 + $0x34] sm:$0xf]
    %v86 = vld [vmem:[%s0 + $0x38] sm:$0xf]
    %v87 = vld [vmem:[%s0 + $0x3c] sm:$0xf]
    %v104 = vunpack.c.l.b16 %v72
    %v105 = vunpack.c.l.b16 %v73
    %v106 = vunpack.c.l.b16 %v74
    %v107 = vunpack.c.l.b16 %v75
    %v108 = vunpack.c.l.b16 %v76
    %v109 = vunpack.c.l.b16 %v77
    %v110 = vunpack.c.l.b16 %v78
    %v111 = vunpack.c.l.b16 %v79
    %v112 = vunpack.c.l.b16 %v80
    %v113 = vunpack.c.l.b16 %v81
    %v114 = vunpack.c.l.b16 %v82
    %v115 = vunpack.c.l.b16 %v83
    %v116 = vunpack.c.l.b16 %v84
    %v117 = vunpack.c.l.b16 %v85
    %v118 = vunpack.c.l.b16 %v86
    %v119 = vunpack.c.l.b16 %v87
    %v120 = vpack.c.b16 %v105, %v104
    %v121 = vpack.c.b16 %v107, %v106
    %v122 = vpack.c.b16 %v109, %v108
    %v123 = vpack.c.b16 %v111, %v110
    %v124 = vpack.c.b16 %v113, %v112
    %v125 = vpack.c.b16 %v115, %v114
    %v126 = vpack.c.b16 %v117, %v116
    %v127 = vpack.c.b16 %v119, %v118
    %v152 = vunpack.c.l.b16 %v40
    %v153 = vunpack.c.l.b16 %v41
    %v154 = vunpack.c.l.b16 %v42
    %v155 = vunpack.c.l.b16 %v43
    %v156 = vunpack.c.l.b16 %v44
    %v157 = vunpack.c.l.b16 %v45
    %v158 = vunpack.c.l.b16 %v46
    %v159 = vunpack.c.l.b16 %v47
    %v160 = vunpack.c.l.b16 %v48
    %v161 = vunpack.c.l.b16 %v49
    %v162 = vunpack.c.l.b16 %v50
    %v163 = vunpack.c.l.b16 %v51
    %v164 = vunpack.c.l.b16 %v52
    %v165 = vunpack.c.l.b16 %v53
    %v166 = vunpack.c.l.b16 %v54
    %v167 = vunpack.c.l.b16 %v55
    %v168 = vpack.c.b16 %v153, %v152
    %v169 = vpack.c.b16 %v155, %v154
    %v170 = vpack.c.b16 %v157, %v156
    %v171 = vpack.c.b16 %v159, %v158
    %v172 = vpack.c.b16 %v161, %v160
    %v173 = vpack.c.b16 %v163, %v162
    %v174 = vpack.c.b16 %v165, %v164
    %v175 = vpack.c.b16 %v167, %v166
    %184 = vmatpush.bf16.msra.mxu0 %v175
    %185 = vmatpush.bf16.msra.mxu0 %v174
    %186 = vmatpush.bf16.msra.mxu0 %v173
    %187 = vmatpush.bf16.msra.mxu0 %v172
    %188 = vmatpush.bf16.msra.mxu0 %v171
    %189 = vmatpush.bf16.msra.mxu0 %v170
    %190 = vmatpush.bf16.msra.mxu0 %v169
    %191 = vmatpush.bf16.msra.mxu0 %v168
    %192 = vmatmul.bf16.gmra.mxu0 %v120
    %v193 = vpop.f32.mrf.mxu0
    %v194 = vadd.f32 0.0, %v193
    %v195 = vpop.f32.mrf.mxu0
    %v196 = vadd.f32 0.0, %v195
    %197 = vmatmul.bf16.gmra.mxu0 %v121
    %v198 = vpop.f32.mrf.mxu0
    %v199 = vadd.f32 0.0, %v198
    %v200 = vpop.f32.mrf.mxu0
    %v201 = vadd.f32 0.0, %v200
    %202 = vmatmul.bf16.gmra.mxu0 %v122
    %v203 = vpop.f32.mrf.mxu0
    %v204 = vadd.f32 0.0, %v203
    %v205 = vpop.f32.mrf.mxu0
    %v206 = vadd.f32 0.0, %v205
    %207 = vmatmul.bf16.gmra.mxu0 %v123
    %v208 = vpop.f32.mrf.mxu0
    %v209 = vadd.f32 0.0, %v208
    %v210 = vpop.f32.mrf.mxu0
    %v211 = vadd.f32 0.0, %v210
    %212 = vmatmul.bf16.gmra.mxu0 %v124
    %v213 = vpop.f32.mrf.mxu0
    %v214 = vadd.f32 0.0, %v213
    %v215 = vpop.f32.mrf.mxu0
    %v216 = vadd.f32 0.0, %v215
    %217 = vmatmul.bf16.gmra.mxu0 %v125
    %v218 = vpop.f32.mrf.mxu0
    %v219 = vadd.f32 0.0, %v218
    %v220 = vpop.f32.mrf.mxu0
    %v221 = vadd.f32 0.0, %v220
    %222 = vmatmul.bf16.gmra.mxu0 %v126
    %v223 = vpop.f32.mrf.mxu0
    %v224 = vadd.f32 0.0, %v223
    %v225 = vpop.f32.mrf.mxu0
    %v226 = vadd.f32 0.0, %v225
    %227 = vmatmul.bf16.gmra.mxu0 %v127
    %v228 = vpop.f32.mrf.mxu0
    %v229 = vadd.f32 0.0, %v228
    %v230 = vpop.f32.mrf.mxu0
    %v231 = vadd.f32 0.0, %v230
    %232 = vdwg.mxu0
    %v233 = vadd.f32 %v56, %v194
    %v234 = vadd.f32 %v57, %v196
    %v235 = vadd.f32 %v58, %v199
    %v236 = vadd.f32 %v59, %v201
    %v237 = vadd.f32 %v60, %v204
    %v238 = vadd.f32 %v61, %v206
    %v239 = vadd.f32 %v62, %v209
    %v240 = vadd.f32 %v63, %v211
    %v241 = vadd.f32 %v64, %v214
    %v242 = vadd.f32 %v65, %v216
    %v243 = vadd.f32 %v66, %v219
    %v244 = vadd.f32 %v67, %v221
    %v245 = vadd.f32 %v68, %v224
    %v246 = vadd.f32 %v69, %v226
    %v247 = vadd.f32 %v70, %v229
    %v248 = vadd.f32 %v71, %v231
    %249 = vst [vmem:[#allocation2] sm:$0xff] %v233
    %250 = vst [vmem:[#allocation2 + $0x8] sm:$0xff] %v234
    %251 = vst [vmem:[#allocation2 + $0x10] sm:$0xff] %v235
    %252 = vst [vmem:[#allocation2 + $0x18] sm:$0xff] %v236
    %253 = vst [vmem:[#allocation2 + $0x20] sm:$0xff] %v237
    %254 = vst [vmem:[#allocation2 + $0x28] sm:$0xff] %v238
    %255 = vst [vmem:[#allocation2 + $0x30] sm:$0xff] %v239
    %256 = vst [vmem:[#allocation2 + $0x38] sm:$0xff] %v240
    %257 = vst [vmem:[#allocation2 + $0x40] sm:$0xff] %v241
    %258 = vst [vmem:[#allocation2 + $0x48] sm:$0xff] %v242
    %259 = vst [vmem:[#allocation2 + $0x50] sm:$0xff] %v243
    %260 = vst [vmem:[#allocation2 + $0x58] sm:$0xff] %v244
    %261 = vst [vmem:[#allocation2 + $0x60] sm:$0xff] %v245
    %262 = vst [vmem:[#allocation2 + $0x68] sm:$0xff] %v246
    %263 = vst [vmem:[#allocation2 + $0x70] sm:$0xff] %v247
    %264 = vst [vmem:[#allocation2 + $0x78] sm:$0xff] %v248
    // Predicated region
    $region18: #{gcn_forward_prepared.5} parent=1 // pred_check
      %p265 = pneg %p15
    $region19: #{gcn_forward_prepared.5} parent=1 // pred_check_branch
      %267 = sbr.rel (%p265) target = $region21
    $region20: #{gcn_forward_prepared.5} parent=1 // pred_region
      %v268 = vld [vmem:[#allocation2] sm:$0xff]
      %v269 = vld [vmem:[#allocation2 + $0x8] sm:$0xff]
      %v270 = vld [vmem:[#allocation2 + $0x10] sm:$0xff]
      %v271 = vld [vmem:[#allocation2 + $0x18] sm:$0xff]
      %v272 = vld [vmem:[#allocation2 + $0x20] sm:$0xff]
      %v273 = vld [vmem:[#allocation2 + $0x28] sm:$0xff]
      %v274 = vld [vmem:[#allocation2 + $0x30] sm:$0xff]
      %v275 = vld [vmem:[#allocation2 + $0x38] sm:$0xff]
      %v276 = vld [vmem:[#allocation2 + $0x40] sm:$0xff]
      %v277 = vld [vmem:[#allocation2 + $0x48] sm:$0xff]
      %v278 = vld [vmem:[#allocation2 + $0x50] sm:$0xff]
      %v279 = vld [vmem:[#allocation2 + $0x58] sm:$0xff]
      %v280 = vld [vmem:[#allocation2 + $0x60] sm:$0xff]
      %v281 = vld [vmem:[#allocation2 + $0x68] sm:$0xff]
      %v282 = vld [vmem:[#allocation2 + $0x70] sm:$0xff]
      %v283 = vld [vmem:[#allocation2 + $0x78] sm:$0xff]
      %v284 = vld [vmem:[%s2] sm:$0x1]
      %v286 = vperm.slane %v284, 0
      %v288 = vadd.f32 %v268, %v286
      %v289 = vadd.f32 %v269, %v286
      %v290 = vadd.f32 %v270, %v286
      %v291 = vadd.f32 %v271, %v286
      %v292 = vadd.f32 %v272, %v286
      %v293 = vadd.f32 %v273, %v286
      %v294 = vadd.f32 %v274, %v286
      %v295 = vadd.f32 %v275, %v286
      %v296 = vadd.f32 %v276, %v286
      %v297 = vadd.f32 %v277, %v286
      %v298 = vadd.f32 %v278, %v286
      %v299 = vadd.f32 %v279, %v286
      %v300 = vadd.f32 %v280, %v286
      %v301 = vadd.f32 %v281, %v286
      %v302 = vadd.f32 %v282, %v286
      %v303 = vadd.f32 %v283, %v286
      %304 = vmax.xlane.f32.xlu0 %v288
      %v305 = vpop.xlane.xlu0 %304
      %306 = vmax.xlane.f32.xlu0 %v289
      %v307 = vpop.xlane.xlu0 %306
      %308 = vmax.xlane.f32.xlu0 %v290
      %v309 = vpop.xlane.xlu0 %308
      %310 = vmax.xlane.f32.xlu0 %v291
      %v311 = vpop.xlane.xlu0 %310
      %312 = vmax.xlane.f32.xlu0 %v292
      %v313 = vpop.xlane.xlu0 %312
      %314 = vmax.xlane.f32.xlu0 %v293
      %v315 = vpop.xlane.xlu0 %314
      %316 = vmax.xlane.f32.xlu0 %v294
      %v317 = vpop.xlane.xlu0 %316
      %318 = vmax.xlane.f32.xlu0 %v295
      %v319 = vpop.xlane.xlu0 %318
      %320 = vmax.xlane.f32.xlu0 %v296
      %v321 = vpop.xlane.xlu0 %320
      %322 = vmax.xlane.f32.xlu0 %v297
      %v323 = vpop.xlane.xlu0 %322
      %324 = vmax.xlane.f32.xlu0 %v298
      %v325 = vpop.xlane.xlu0 %324
      %326 = vmax.xlane.f32.xlu0 %v299
      %v327 = vpop.xlane.xlu0 %326
      %328 = vmax.xlane.f32.xlu0 %v300
      %v329 = vpop.xlane.xlu0 %328
      %330 = vmax.xlane.f32.xlu0 %v301
      %v331 = vpop.xlane.xlu0 %330
      %332 = vmax.xlane.f32.xlu0 %v302
      %v333 = vpop.xlane.xlu0 %332
      %334 = vmax.xlane.f32.xlu0 %v303
      %v335 = vpop.xlane.xlu0 %334
      %v336 = vsub.f32 %v288, %v305
      %v337 = vsub.f32 %v289, %v307
      %v338 = vsub.f32 %v290, %v309
      %v339 = vsub.f32 %v291, %v311
      %v340 = vsub.f32 %v292, %v313
      %v341 = vsub.f32 %v293, %v315
      %v342 = vsub.f32 %v294, %v317
      %v343 = vsub.f32 %v295, %v319
      %v344 = vsub.f32 %v296, %v321
      %v345 = vsub.f32 %v297, %v323
      %v346 = vsub.f32 %v298, %v325
      %v347 = vsub.f32 %v299, %v327
      %v348 = vsub.f32 %v300, %v329
      %v349 = vsub.f32 %v301, %v331
      %v350 = vsub.f32 %v302, %v333
      %v351 = vsub.f32 %v303, %v335
      %v352 = vmul.f32 %v336, 1.442695
      %v353 = vpow.pop %v352
      %v354 = vmul.f32 %v337, 1.442695
      %v355 = vpow.pop %v354
      %v356 = vmul.f32 %v338, 1.442695
      %v357 = vpow.pop %v356
      %v358 = vmul.f32 %v339, 1.442695
      %v359 = vpow.pop %v358
      %v360 = vmul.f32 %v340, 1.442695
      %v361 = vpow.pop %v360
      %v362 = vmul.f32 %v341, 1.442695
      %v363 = vpow.pop %v362
      %v364 = vmul.f32 %v342, 1.442695
      %v365 = vpow.pop %v364
      %v366 = vmul.f32 %v343, 1.442695
      %v367 = vpow.pop %v366
      %v368 = vmul.f32 %v344, 1.442695
      %v369 = vpow.pop %v368
      %v370 = vmul.f32 %v345, 1.442695
      %v371 = vpow.pop %v370
      %v372 = vmul.f32 %v346, 1.442695
      %v373 = vpow.pop %v372
      %v374 = vmul.f32 %v347, 1.442695
      %v375 = vpow.pop %v374
      %v376 = vmul.f32 %v348, 1.442695
      %v377 = vpow.pop %v376
      %v378 = vmul.f32 %v349, 1.442695
      %v379 = vpow.pop %v378
      %v380 = vmul.f32 %v350, 1.442695
      %v381 = vpow.pop %v380
      %v382 = vmul.f32 %v351, 1.442695
      %v383 = vpow.pop %v382
      %384 = vadd.xlane.f32.xlu0 %v353
      %v385 = vpop.xlane.xlu0 %384
      %386 = vadd.xlane.f32.xlu0 %v355
      %v387 = vpop.xlane.xlu0 %386
      %388 = vadd.xlane.f32.xlu0 %v357
      %v389 = vpop.xlane.xlu0 %388
      %390 = vadd.xlane.f32.xlu0 %v359
      %v391 = vpop.xlane.xlu0 %390
      %392 = vadd.xlane.f32.xlu0 %v361
      %v393 = vpop.xlane.xlu0 %392
      %394 = vadd.xlane.f32.xlu0 %v363
      %v395 = vpop.xlane.xlu0 %394
      %396 = vadd.xlane.f32.xlu0 %v365
      %v397 = vpop.xlane.xlu0 %396
      %398 = vadd.xlane.f32.xlu0 %v367
      %v399 = vpop.xlane.xlu0 %398
      %400 = vadd.xlane.f32.xlu0 %v369
      %v401 = vpop.xlane.xlu0 %400
      %402 = vadd.xlane.f32.xlu0 %v371
      %v403 = vpop.xlane.xlu0 %402
      %404 = vadd.xlane.f32.xlu0 %v373
      %v405 = vpop.xlane.xlu0 %404
      %406 = vadd.xlane.f32.xlu0 %v375
      %v407 = vpop.xlane.xlu0 %406
      %408 = vadd.xlane.f32.xlu0 %v377
      %v409 = vpop.xlane.xlu0 %408
      %410 = vadd.xlane.f32.xlu0 %v379
      %v411 = vpop.xlane.xlu0 %410
      %412 = vadd.xlane.f32.xlu0 %v381
      %v413 = vpop.xlane.xlu0 %412
      %414 = vadd.xlane.f32.xlu0 %v383
      %v415 = vpop.xlane.xlu0 %414
      %v416 = vlog2.pop %v385
      %v417 = vmul.f32 %v416, 0.6931472
      %v418 = vlog2.pop %v387
      %v419 = vmul.f32 %v418, 0.6931472
      %v420 = vlog2.pop %v389
      %v421 = vmul.f32 %v420, 0.6931472
      %v422 = vlog2.pop %v391
      %v423 = vmul.f32 %v422, 0.6931472
      %v424 = vlog2.pop %v393
      %v425 = vmul.f32 %v424, 0.6931472
      %v426 = vlog2.pop %v395
      %v427 = vmul.f32 %v426, 0.6931472
      %v428 = vlog2.pop %v397
      %v429 = vmul.f32 %v428, 0.6931472
      %v430 = vlog2.pop %v399
      %v431 = vmul.f32 %v430, 0.6931472
      %v432 = vlog2.pop %v401
      %v433 = vmul.f32 %v432, 0.6931472
      %v434 = vlog2.pop %v403
      %v435 = vmul.f32 %v434, 0.6931472
      %v436 = vlog2.pop %v405
      %v437 = vmul.f32 %v436, 0.6931472
      %v438 = vlog2.pop %v407
      %v439 = vmul.f32 %v438, 0.6931472
      %v440 = vlog2.pop %v409
      %v441 = vmul.f32 %v440, 0.6931472
      %v442 = vlog2.pop %v411
      %v443 = vmul.f32 %v442, 0.6931472
      %v444 = vlog2.pop %v413
      %v445 = vmul.f32 %v444, 0.6931472
      %v446 = vlog2.pop %v415
      %v447 = vmul.f32 %v446, 0.6931472
      %v448 = vsub.f32 %v336, %v417
      %v449 = vsub.f32 %v337, %v419
      %v450 = vsub.f32 %v338, %v421
      %v451 = vsub.f32 %v339, %v423
      %v452 = vsub.f32 %v340, %v425
      %v453 = vsub.f32 %v341, %v427
      %v454 = vsub.f32 %v342, %v429
      %v455 = vsub.f32 %v343, %v431
      %v456 = vsub.f32 %v344, %v433
      %v457 = vsub.f32 %v345, %v435
      %v458 = vsub.f32 %v346, %v437
      %v459 = vsub.f32 %v347, %v439
      %v460 = vsub.f32 %v348, %v441
      %v461 = vsub.f32 %v349, %v443
      %v462 = vsub.f32 %v350, %v445
      %v463 = vsub.f32 %v351, %v447
      %464 = vst [vmem:[#allocation3] sm:$0xff] %v448
      %465 = vst [vmem:[#allocation3 + $0x8] sm:$0xff] %v449
      %466 = vst [vmem:[#allocation3 + $0x10] sm:$0xff] %v450
      %467 = vst [vmem:[#allocation3 + $0x18] sm:$0xff] %v451
      %468 = vst [vmem:[#allocation3 + $0x20] sm:$0xff] %v452
      %469 = vst [vmem:[#allocation3 + $0x28] sm:$0xff] %v453
      %470 = vst [vmem:[#allocation3 + $0x30] sm:$0xff] %v454
      %471 = vst [vmem:[#allocation3 + $0x38] sm:$0xff] %v455
      %472 = vst [vmem:[#allocation3 + $0x40] sm:$0xff] %v456
      %473 = vst [vmem:[#allocation3 + $0x48] sm:$0xff] %v457
      %474 = vst [vmem:[#allocation3 + $0x50] sm:$0xff] %v458
      %475 = vst [vmem:[#allocation3 + $0x58] sm:$0xff] %v459
      %476 = vst [vmem:[#allocation3 + $0x60] sm:$0xff] %v460
      %477 = vst [vmem:[#allocation3 + $0x68] sm:$0xff] %v461
      %478 = vst [vmem:[#allocation3 + $0x70] sm:$0xff] %v462
      %479 = vst [vmem:[#allocation3 + $0x78] sm:$0xff] %v463
    $region21: #{gcn_forward_prepared.5} parent=1 // pred_fallthru
      _
    // Predicated region
    $region22: #{gcn_forward_prepared.5} parent=1 // pred_check
      _
    $region23: #{gcn_forward_prepared.5} parent=1 // pred_check_branch
      %481 = sbr.rel (0) target = $region25
    $region24: #{gcn_forward_prepared.5} parent=1 // pred_region
      %483 = vsyncadd [#allocation4], 0
      %s484 = sshll.u32 [#allocation3], 4
      %s485 = int_to_ptr.vmem [resolvable:$true] %s484
      %s486 = sshll.u32 %s3, 4
      %s487 = int_to_ptr.hbm [resolvable:$true] %s486
      %492 = dma.vmem_to_hbm [thread:$0]  %s485, 2048, %s487, [#allocation4], 128, 128, 8
    $region25: #{gcn_forward_prepared.5} parent=1 // pred_fallthru
      _
    // Predicated region
    $region26: #{gcn_forward_prepared.5} parent=1 // pred_check
      _
    $region27: #{gcn_forward_prepared.5} parent=1 // pred_check_branch
      %494 = sbr.rel (0) target = $region29
    $region28: #{gcn_forward_prepared.5} parent=1 // pred_region
      %496 = dma.done [#allocation4], 2048
    $region29: #{gcn_forward_prepared.5} parent=1 // pred_fallthru
      _
    %497 = vsyncpa [#allocation4], 1

// kernel: gcn_forward_prepared.4
$region0: #{gcn_forward_prepared.4}
  #allocation0 [shape = 'u32[]', space=smem, size = 0x4, offset = 0x4, fixed_abs, tag = 'smem constant byte address 0x4 - core index']
  #allocation1 [shape = 'u32[72,128]{1,0:T(1,128)}', space=vmem, size = 0x9000, scoped, tag = 'internal scratch']
  #allocation2 [shape = 'f32[128,128]{1,0:T(8,128)}', space=vmem, size = 0x10000, scoped, tag = 'scratch operand']
  %s0 = inlined_call_operand.vmem [shape: bf16[128,128], index: 0, kind: input, shape index: {}]
  %s1 = inlined_call_operand.vmem [shape: bf16[128,128], index: 1, kind: input, shape index: {}]
  %s2 = inlined_call_operand.vmem [shape: f32[1,128], index: 2, kind: input, shape index: {}]
  %s3 = inlined_call_operand.vmem [shape: bf16[128,128], index: 3, kind: input, shape index: {}]
  %s4 = inlined_call_operand.vmem [shape: bf16[128,128], index: 4, kind: output, shape index: {}]
  %s5 = sld [smem:[#allocation0]]
  $region34: #{gcn_forward_prepared.4} parent=0
    _
  %s7 = ssub.s32 1, %s5
  %s8 = scalar_select 0, %s7, %s5
  // Predicated region
  $region2: #{gcn_forward_prepared.4} parent=0 // pred_check
    _
  $region3: #{gcn_forward_prepared.4} parent=0 // pred_check_branch
    %10 = sbr.rel (0) target = $region5
  $region4: #{gcn_forward_prepared.4} parent=0 // pred_region
    _
  $region5: #{gcn_forward_prepared.4} parent=0 // pred_fallthru
    _
  // Predicated region
  $region6: #{gcn_forward_prepared.4} parent=0 // pred_check
    _
  $region7: #{gcn_forward_prepared.4} parent=0 // pred_check_branch
    %12 = sbr.rel (0) target = $region9
  $region8: #{gcn_forward_prepared.4} parent=0 // pred_region
    _
  $region9: #{gcn_forward_prepared.4} parent=0 // pred_fallthru
    _
  // Predicated region
  $region10: #{gcn_forward_prepared.4} parent=0 // pred_check
    _
  $region11: #{gcn_forward_prepared.4} parent=0 // pred_check_branch
    %14 = sbr.rel (0) target = $region13
  $region12: #{gcn_forward_prepared.4} parent=0 // pred_region
    _
  $region13: #{gcn_forward_prepared.4} parent=0 // pred_fallthru
    _
  // Predicated region
  $region14: #{gcn_forward_prepared.4} parent=0 // pred_check
    _
  $region15: #{gcn_forward_prepared.4} parent=0 // pred_check_branch
    %16 = sbr.rel (0) target = $region17
  $region16: #{gcn_forward_prepared.4} parent=0 // pred_region
    _
  $region17: #{gcn_forward_prepared.4} parent=0 // pred_fallthru
    _
  %p17 = scmp.eq.s32.totalorder 0, 0
  // Predicated region
  $region18: #{gcn_forward_prepared.4} parent=0 // pred_check
    %p18 = pneg %p17
  $region19: #{gcn_forward_prepared.4} parent=0 // pred_check_branch
    %20 = sbr.rel (%p18) target = $region21
  $region20: #{gcn_forward_prepared.4} parent=0 // pred_region
    %21 = vst [vmem:[#allocation2] sm:$0xff] 0.0
    %22 = vst [vmem:[#allocation2 + $0x8] sm:$0xff] 0.0
    %23 = vst [vmem:[#allocation2 + $0x10] sm:$0xff] 0.0
    %24 = vst [vmem:[#allocation2 + $0x18] sm:$0xff] 0.0
    %25 = vst [vmem:[#allocation2 + $0x20] sm:$0xff] 0.0
    %26 = vst [vmem:[#allocation2 + $0x28] sm:$0xff] 0.0
    %27 = vst [vmem:[#allocation2 + $0x30] sm:$0xff] 0.0
    %28 = vst [vmem:[#allocation2 + $0x38] sm:$0xff] 0.0
    %29 = vst [vmem:[#allocation2 + $0x40] sm:$0xff] 0.0
    %30 = vst [vmem:[#allocation2 + $0x48] sm:$0xff] 0.0
    %31 = vst [vmem:[#allocation2 + $0x50] sm:$0xff] 0.0
    %32 = vst [vmem:[#allocation2 + $0x58] sm:$0xff] 0.0
    %33 = vst [vmem:[#allocation2 + $0x60] sm:$0xff] 0.0
    %34 = vst [vmem:[#allocation2 + $0x68] sm:$0xff] 0.0
    %35 = vst [vmem:[#allocation2 + $0x70] sm:$0xff] 0.0
    %36 = vst [vmem:[#allocation2 + $0x78] sm:$0xff] 0.0
  $region21: #{gcn_forward_prepared.4} parent=0 // pred_fallthru
    _
  %s37 = smul.u32 0, 128
  %s38 = sshra.s32 %s37, 3
  %s39 = sand.u32 %s37, 7
  %s40 = smul.addr %s38, 4
  %s41 = scalar_lea.vmem %s1, %s40
  %v42 = vld [vmem:[%s41] sm:$0xf]
  %v43 = vld [vmem:[%s41 + $0x4] sm:$0xf]
  %v44 = vld [vmem:[%s41 + $0x8] sm:$0xf]
  %v45 = vld [vmem:[%s41 + $0xc] sm:$0xf]
  %v46 = vld [vmem:[%s41 + $0x10] sm:$0xf]
  %v47 = vld [vmem:[%s41 + $0x14] sm:$0xf]
  %v48 = vld [vmem:[%s41 + $0x18] sm:$0xf]
  %v49 = vld [vmem:[%s41 + $0x1c] sm:$0xf]
  %v50 = vld [vmem:[%s41 + $0x20] sm:$0xf]
  %v51 = vld [vmem:[%s41 + $0x24] sm:$0xf]
  %v52 = vld [vmem:[%s41 + $0x28] sm:$0xf]
  %v53 = vld [vmem:[%s41 + $0x2c] sm:$0xf]
  %v54 = vld [vmem:[%s41 + $0x30] sm:$0xf]
  %v55 = vld [vmem:[%s41 + $0x34] sm:$0xf]
  %v56 = vld [vmem:[%s41 + $0x38] sm:$0xf]
  %v57 = vld [vmem:[%s41 + $0x3c] sm:$0xf]
  %v58 = vld [vmem:[#allocation2] sm:$0xff]
  %v59 = vld [vmem:[#allocation2 + $0x8] sm:$0xff]
  %v60 = vld [vmem:[#allocation2 + $0x10] sm:$0xff]
  %v61 = vld [vmem:[#allocation2 + $0x18] sm:$0xff]
  %v62 = vld [vmem:[#allocation2 + $0x20] sm:$0xff]
  %v63 = vld [vmem:[#allocation2 + $0x28] sm:$0xff]
  %v64 = vld [vmem:[#allocation2 + $0x30] sm:$0xff]
  %v65 = vld [vmem:[#allocation2 + $0x38] sm:$0xff]
  %v66 = vld [vmem:[#allocation2 + $0x40] sm:$0xff]
  %v67 = vld [vmem:[#allocation2 + $0x48] sm:$0xff]
  %v68 = vld [vmem:[#allocation2 + $0x50] sm:$0xff]
  %v69 = vld [vmem:[#allocation2 + $0x58] sm:$0xff]
  %v70 = vld [vmem:[#allocation2 + $0x60] sm:$0xff]
  %v71 = vld [vmem:[#allocation2 + $0x68] sm:$0xff]
  %v72 = vld [vmem:[#allocation2 + $0x70] sm:$0xff]
  %v73 = vld [vmem:[#allocation2 + $0x78] sm:$0xff]
  %v74 = vld [vmem:[%s0] sm:$0xf]
  %v75 = vld [vmem:[%s0 + $0x4] sm:$0xf]
  %v76 = vld [vmem:[%s0 + $0x8] sm:$0xf]
  %v77 = vld [vmem:[%s0 + $0xc] sm:$0xf]
  %v78 = vld [vmem:[%s0 + $0x10] sm:$0xf]
  %v79 = vld [vmem:[%s0 + $0x14] sm:$0xf]
  %v80 = vld [vmem:[%s0 + $0x18] sm:$0xf]
  %v81 = vld [vmem:[%s0 + $0x1c] sm:$0xf]
  %v82 = vld [vmem:[%s0 + $0x20] sm:$0xf]
  %v83 = vld [vmem:[%s0 + $0x24] sm:$0xf]
  %v84 = vld [vmem:[%s0 + $0x28] sm:$0xf]
  %v85 = vld [vmem:[%s0 + $0x2c] sm:$0xf]
  %v86 = vld [vmem:[%s0 + $0x30] sm:$0xf]
  %v87 = vld [vmem:[%s0 + $0x34] sm:$0xf]
  %v88 = vld [vmem:[%s0 + $0x38] sm:$0xf]
  %v89 = vld [vmem:[%s0 + $0x3c] sm:$0xf]
  %v106 = vunpack.c.l.b16 %v74
  %v107 = vunpack.c.l.b16 %v75
  %v108 = vunpack.c.l.b16 %v76
  %v109 = vunpack.c.l.b16 %v77
  %v110 = vunpack.c.l.b16 %v78
  %v111 = vunpack.c.l.b16 %v79
  %v112 = vunpack.c.l.b16 %v80
  %v113 = vunpack.c.l.b16 %v81
  %v114 = vunpack.c.l.b16 %v82
  %v115 = vunpack.c.l.b16 %v83
  %v116 = vunpack.c.l.b16 %v84
  %v117 = vunpack.c.l.b16 %v85
  %v118 = vunpack.c.l.b16 %v86
  %v119 = vunpack.c.l.b16 %v87
  %v120 = vunpack.c.l.b16 %v88
  %v121 = vunpack.c.l.b16 %v89
  %v122 = vpack.c.b16 %v107, %v106
  %v123 = vpack.c.b16 %v109, %v108
  %v124 = vpack.c.b16 %v111, %v110
  %v125 = vpack.c.b16 %v113, %v112
  %v126 = vpack.c.b16 %v115, %v114
  %v127 = vpack.c.b16 %v117, %v116
  %v128 = vpack.c.b16 %v119, %v118
  %v129 = vpack.c.b16 %v121, %v120
  %v154 = vunpack.c.l.b16 %v42
  %v155 = vunpack.c.l.b16 %v43
  %v156 = vunpack.c.l.b16 %v44
  %v157 = vunpack.c.l.b16 %v45
  %v158 = vunpack.c.l.b16 %v46
  %v159 = vunpack.c.l.b16 %v47
  %v160 = vunpack.c.l.b16 %v48
  %v161 = vunpack.c.l.b16 %v49
  %v162 = vunpack.c.l.b16 %v50
  %v163 = vunpack.c.l.b16 %v51
  %v164 = vunpack.c.l.b16 %v52
  %v165 = vunpack.c.l.b16 %v53
  %v166 = vunpack.c.l.b16 %v54
  %v167 = vunpack.c.l.b16 %v55
  %v168 = vunpack.c.l.b16 %v56
  %v169 = vunpack.c.l.b16 %v57
  %v170 = vpack.c.b16 %v155, %v154
  %v171 = vpack.c.b16 %v157, %v156
  %v172 = vpack.c.b16 %v159, %v158
  %v173 = vpack.c.b16 %v161, %v160
  %v174 = vpack.c.b16 %v163, %v162
  %v175 = vpack.c.b16 %v165, %v164
  %v176 = vpack.c.b16 %v167, %v166
  %v177 = vpack.c.b16 %v169, %v168
  %186 = vmatpush.bf16.msra.mxu0 %v177
  %187 = vmatpush.bf16.msra.mxu0 %v176
  %188 = vmatpush.bf16.msra.mxu0 %v175
  %189 = vmatpush.bf16.msra.mxu0 %v174
  %190 = vmatpush.bf16.msra.mxu0 %v173
  %191 = vmatpush.bf16.msra.mxu0 %v172
  %192 = vmatpush.bf16.msra.mxu0 %v171
  %193 = vmatpush.bf16.msra.mxu0 %v170
  %194 = vmatmul.bf16.gmra.mxu0 %v122
  %v195 = vpop.f32.mrf.mxu0
  %v196 = vadd.f32 0.0, %v195
  %v197 = vpop.f32.mrf.mxu0
  %v198 = vadd.f32 0.0, %v197
  %199 = vmatmul.bf16.gmra.mxu0 %v123
  %v200 = vpop.f32.mrf.mxu0
  %v201 = vadd.f32 0.0, %v200
  %v202 = vpop.f32.mrf.mxu0
  %v203 = vadd.f32 0.0, %v202
  %204 = vmatmul.bf16.gmra.mxu0 %v124
  %v205 = vpop.f32.mrf.mxu0
  %v206 = vadd.f32 0.0, %v205
  %v207 = vpop.f32.mrf.mxu0
  %v208 = vadd.f32 0.0, %v207
  %209 = vmatmul.bf16.gmra.mxu0 %v125
  %v210 = vpop.f32.mrf.mxu0
  %v211 = vadd.f32 0.0, %v210
  %v212 = vpop.f32.mrf.mxu0
  %v213 = vadd.f32 0.0, %v212
  %214 = vmatmul.bf16.gmra.mxu0 %v126
  %v215 = vpop.f32.mrf.mxu0
  %v216 = vadd.f32 0.0, %v215
  %v217 = vpop.f32.mrf.mxu0
  %v218 = vadd.f32 0.0, %v217
  %219 = vmatmul.bf16.gmra.mxu0 %v127
  %v220 = vpop.f32.mrf.mxu0
  %v221 = vadd.f32 0.0, %v220
  %v222 = vpop.f32.mrf.mxu0
  %v223 = vadd.f32 0.0, %v222
  %224 = vmatmul.bf16.gmra.mxu0 %v128
  %v225 = vpop.f32.mrf.mxu0
  %v226 = vadd.f32 0.0, %v225
  %v227 = vpop.f32.mrf.mxu0
  %v228 = vadd.f32 0.0, %v227
  %229 = vmatmul.bf16.gmra.mxu0 %v129
  %v230 = vpop.f32.mrf.mxu0
  %v231 = vadd.f32 0.0, %v230
  %v232 = vpop.f32.mrf.mxu0
  %v233 = vadd.f32 0.0, %v232
  %234 = vdwg.mxu0
  %v235 = vadd.f32 %v58, %v196
  %v236 = vadd.f32 %v59, %v198
  %v237 = vadd.f32 %v60, %v201
  %v238 = vadd.f32 %v61, %v203
  %v239 = vadd.f32 %v62, %v206
  %v240 = vadd.f32 %v63, %v208
  %v241 = vadd.f32 %v64, %v211
  %v242 = vadd.f32 %v65, %v213
  %v243 = vadd.f32 %v66, %v216
  %v244 = vadd.f32 %v67, %v218
  %v245 = vadd.f32 %v68, %v221
  %v246 = vadd.f32 %v69, %v223
  %v247 = vadd.f32 %v70, %v226
  %v248 = vadd.f32 %v71, %v228
  %v249 = vadd.f32 %v72, %v231
  %v250 = vadd.f32 %v73, %v233
  %251 = vst [vmem:[#allocation2] sm:$0xff] %v235
  %252 = vst [vmem:[#allocation2 + $0x8] sm:$0xff] %v236
  %253 = vst [vmem:[#allocation2 + $0x10] sm:$0xff] %v237
  %254 = vst [vmem:[#allocation2 + $0x18] sm:$0xff] %v238
  %255 = vst [vmem:[#allocation2 + $0x20] sm:$0xff] %v239
  %256 = vst [vmem:[#allocation2 + $0x28] sm:$0xff] %v240
  %257 = vst [vmem:[#allocation2 + $0x30] sm:$0xff] %v241
  %258 = vst [vmem:[#allocation2 + $0x38] sm:$0xff] %v242
  %259 = vst [vmem:[#allocation2 + $0x40] sm:$0xff] %v243
  %260 = vst [vmem:[#allocation2 + $0x48] sm:$0xff] %v244
  %261 = vst [vmem:[#allocation2 + $0x50] sm:$0xff] %v245
  %262 = vst [vmem:[#allocation2 + $0x58] sm:$0xff] %v246
  %263 = vst [vmem:[#allocation2 + $0x60] sm:$0xff] %v247
  %264 = vst [vmem:[#allocation2 + $0x68] sm:$0xff] %v248
  %265 = vst [vmem:[#allocation2 + $0x70] sm:$0xff] %v249
  %266 = vst [vmem:[#allocation2 + $0x78] sm:$0xff] %v250
  // Predicated region
  $region22: #{gcn_forward_prepared.4} parent=0 // pred_check
    %p267 = pneg %p17
  $region23: #{gcn_forward_prepared.4} parent=0 // pred_check_branch
    %269 = sbr.rel (%p267) target = $region25
  $region24: #{gcn_forward_prepared.4} parent=0 // pred_region
    %v270 = vld [vmem:[#allocation2] sm:$0xff]
    %v271 = vld [vmem:[#allocation2 + $0x8] sm:$0xff]
    %v272 = vld [vmem:[#allocation2 + $0x10] sm:$0xff]
    %v273 = vld [vmem:[#allocation2 + $0x18] sm:$0xff]
    %v274 = vld [vmem:[#allocation2 + $0x20] sm:$0xff]
    %v275 = vld [vmem:[#allocation2 + $0x28] sm:$0xff]
    %v276 = vld [vmem:[#allocation2 + $0x30] sm:$0xff]
    %v277 = vld [vmem:[#allocation2 + $0x38] sm:$0xff]
    %v278 = vld [vmem:[#allocation2 + $0x40] sm:$0xff]
    %v279 = vld [vmem:[#allocation2 + $0x48] sm:$0xff]
    %v280 = vld [vmem:[#allocation2 + $0x50] sm:$0xff]
    %v281 = vld [vmem:[#allocation2 + $0x58] sm:$0xff]
    %v282 = vld [vmem:[#allocation2 + $0x60] sm:$0xff]
    %v283 = vld [vmem:[#allocation2 + $0x68] sm:$0xff]
    %v284 = vld [vmem:[#allocation2 + $0x70] sm:$0xff]
    %v285 = vld [vmem:[#allocation2 + $0x78] sm:$0xff]
    %v286 = vld [vmem:[%s2] sm:$0x1]
    %v288 = vperm.slane %v286, 0
    %v290 = vadd.f32 %v270, %v288
    %v291 = vadd.f32 %v271, %v288
    %v292 = vadd.f32 %v272, %v288
    %v293 = vadd.f32 %v273, %v288
    %v294 = vadd.f32 %v274, %v288
    %v295 = vadd.f32 %v275, %v288
    %v296 = vadd.f32 %v276, %v288
    %v297 = vadd.f32 %v277, %v288
    %v298 = vadd.f32 %v278, %v288
    %v299 = vadd.f32 %v279, %v288
    %v300 = vadd.f32 %v280, %v288
    %v301 = vadd.f32 %v281, %v288
    %v302 = vadd.f32 %v282, %v288
    %v303 = vadd.f32 %v283, %v288
    %v304 = vadd.f32 %v284, %v288
    %v305 = vadd.f32 %v285, %v288
    %v306 = vmax.f32 %v290, 0.0
    %v307 = vmax.f32 %v291, 0.0
    %v308 = vmax.f32 %v292, 0.0
    %v309 = vmax.f32 %v293, 0.0
    %v310 = vmax.f32 %v294, 0.0
    %v311 = vmax.f32 %v295, 0.0
    %v312 = vmax.f32 %v296, 0.0
    %v313 = vmax.f32 %v297, 0.0
    %v314 = vmax.f32 %v298, 0.0
    %v315 = vmax.f32 %v299, 0.0
    %v316 = vmax.f32 %v300, 0.0
    %v317 = vmax.f32 %v301, 0.0
    %v318 = vmax.f32 %v302, 0.0
    %v319 = vmax.f32 %v303, 0.0
    %v320 = vmax.f32 %v304, 0.0
    %v321 = vmax.f32 %v305, 0.0
    %v322 = vpack.c.bf16 %v307, %v306
    %v323 = vpack.c.bf16 %v309, %v308
    %v324 = vpack.c.bf16 %v311, %v310
    %v325 = vpack.c.bf16 %v313, %v312
    %v326 = vpack.c.bf16 %v315, %v314
    %v327 = vpack.c.bf16 %v317, %v316
    %v328 = vpack.c.bf16 %v319, %v318
    %v329 = vpack.c.bf16 %v321, %v320
    %v330 = vld [vmem:[%s3] sm:$0xf]
    %v331 = vld [vmem:[%s3 + $0x4] sm:$0xf]
    %v332 = vld [vmem:[%s3 + $0x8] sm:$0xf]
    %v333 = vld [vmem:[%s3 + $0xc] sm:$0xf]
    %v334 = vld [vmem:[%s3 + $0x10] sm:$0xf]
    %v335 = vld [vmem:[%s3 + $0x14] sm:$0xf]
    %v336 = vld [vmem:[%s3 + $0x18] sm:$0xf]
    %v337 = vld [vmem:[%s3 + $0x1c] sm:$0xf]
    %v338 = vld [vmem:[%s3 + $0x20] sm:$0xf]
    %v339 = vld [vmem:[%s3 + $0x24] sm:$0xf]
    %v340 = vld [vmem:[%s3 + $0x28] sm:$0xf]
    %v341 = vld [vmem:[%s3 + $0x2c] sm:$0xf]
    %v342 = vld [vmem:[%s3 + $0x30] sm:$0xf]
    %v343 = vld [vmem:[%s3 + $0x34] sm:$0xf]
    %v344 = vld [vmem:[%s3 + $0x38] sm:$0xf]
    %v345 = vld [vmem:[%s3 + $0x3c] sm:$0xf]
    %v362 = vunpack.c.l.b16 %v330
    %v363 = vunpack.c.l.b16 %v331
    %v364 = vunpack.c.l.b16 %v332
    %v365 = vunpack.c.l.b16 %v333
    %v366 = vunpack.c.l.b16 %v334
    %v367 = vunpack.c.l.b16 %v335
    %v368 = vunpack.c.l.b16 %v336
    %v369 = vunpack.c.l.b16 %v337
    %v370 = vunpack.c.l.b16 %v338
    %v371 = vunpack.c.l.b16 %v339
    %v372 = vunpack.c.l.b16 %v340
    %v373 = vunpack.c.l.b16 %v341
    %v374 = vunpack.c.l.b16 %v342
    %v375 = vunpack.c.l.b16 %v343
    %v376 = vunpack.c.l.b16 %v344
    %v377 = vunpack.c.l.b16 %v345
    %v378 = vpack.c.b16 %v363, %v362
    %v379 = vpack.c.b16 %v365, %v364
    %v380 = vpack.c.b16 %v367, %v366
    %v381 = vpack.c.b16 %v369, %v368
    %v382 = vpack.c.b16 %v371, %v370
    %v383 = vpack.c.b16 %v373, %v372
    %v384 = vpack.c.b16 %v375, %v374
    %v385 = vpack.c.b16 %v377, %v376
    %394 = vmatpush.bf16.msra.mxu0 %v385
    %395 = vmatpush.bf16.msra.mxu0 %v384
    %396 = vmatpush.bf16.msra.mxu0 %v383
    %397 = vmatpush.bf16.msra.mxu0 %v382
    %398 = vmatpush.bf16.msra.mxu0 %v381
    %399 = vmatpush.bf16.msra.mxu0 %v380
    %400 = vmatpush.bf16.msra.mxu0 %v379
    %401 = vmatpush.bf16.msra.mxu0 %v378
    %402 = vmatmul.bf16.gmra.mxu0 %v322
    %v403 = vpop.f32.mrf.mxu0
    %v404 = vadd.f32 0.0, %v403
    %v405 = vpop.f32.mrf.mxu0
    %v406 = vadd.f32 0.0, %v405
    %407 = vmatmul.bf16.gmra.mxu0 %v323
    %v408 = vpop.f32.mrf.mxu0
    %v409 = vadd.f32 0.0, %v408
    %v410 = vpop.f32.mrf.mxu0
    %v411 = vadd.f32 0.0, %v410
    %412 = vmatmul.bf16.gmra.mxu0 %v324
    %v413 = vpop.f32.mrf.mxu0
    %v414 = vadd.f32 0.0, %v413
    %v415 = vpop.f32.mrf.mxu0
    %v416 = vadd.f32 0.0, %v415
    %417 = vmatmul.bf16.gmra.mxu0 %v325
    %v418 = vpop.f32.mrf.mxu0
    %v419 = vadd.f32 0.0, %v418
    %v420 = vpop.f32.mrf.mxu0
    %v421 = vadd.f32 0.0, %v420
    %422 = vmatmul.bf16.gmra.mxu0 %v326
    %v423 = vpop.f32.mrf.mxu0
    %v424 = vadd.f32 0.0, %v423
    %v425 = vpop.f32.mrf.mxu0
    %v426 = vadd.f32 0.0, %v425
    %427 = vmatmul.bf16.gmra.mxu0 %v327
    %v428 = vpop.f32.mrf.mxu0
    %v429 = vadd.f32 0.0, %v428
    %v430 = vpop.f32.mrf.mxu0
    %v431 = vadd.f32 0.0, %v430
    %432 = vmatmul.bf16.gmra.mxu0 %v328
    %v433 = vpop.f32.mrf.mxu0
    %v434 = vadd.f32 0.0, %v433
    %v435 = vpop.f32.mrf.mxu0
    %v436 = vadd.f32 0.0, %v435
    %437 = vmatmul.bf16.gmra.mxu0 %v329
    %v438 = vpop.f32.mrf.mxu0
    %v439 = vadd.f32 0.0, %v438
    %v440 = vpop.f32.mrf.mxu0
    %v441 = vadd.f32 0.0, %v440
    %442 = vdwg.mxu0
    %v443 = vpack.c.bf16 %v404, %v404
    %v444 = vpack.c.bf16 %v406, %v406
    %v445 = vpack.c.bf16 %v409, %v409
    %v446 = vpack.c.bf16 %v411, %v411
    %v447 = vpack.c.bf16 %v414, %v414
    %v448 = vpack.c.bf16 %v416, %v416
    %v449 = vpack.c.bf16 %v419, %v419
    %v450 = vpack.c.bf16 %v421, %v421
    %v451 = vpack.c.bf16 %v424, %v424
    %v452 = vpack.c.bf16 %v426, %v426
    %v453 = vpack.c.bf16 %v429, %v429
    %v454 = vpack.c.bf16 %v431, %v431
    %v455 = vpack.c.bf16 %v434, %v434
    %v456 = vpack.c.bf16 %v436, %v436
    %v457 = vpack.c.bf16 %v439, %v439
    %v458 = vpack.c.bf16 %v441, %v441
    %459 = vst [vmem:[%s4] sm:$0xf] %v443
    %460 = vst [vmem:[%s4 + $0x4] sm:$0xf] %v444
    %461 = vst [vmem:[%s4 + $0x8] sm:$0xf] %v445
    %462 = vst [vmem:[%s4 + $0xc] sm:$0xf] %v446
    %463 = vst [vmem:[%s4 + $0x10] sm:$0xf] %v447
    %464 = vst [vmem:[%s4 + $0x14] sm:$0xf] %v448
    %465 = vst [vmem:[%s4 + $0x18] sm:$0xf] %v449
    %466 = vst [vmem:[%s4 + $0x1c] sm:$0xf] %v450
    %467 = vst [vmem:[%s4 + $0x20] sm:$0xf] %v451
    %468 = vst [vmem:[%s4 + $0x24] sm:$0xf] %v452
    %469 = vst [vmem:[%s4 + $0x28] sm:$0xf] %v453
    %470 = vst [vmem:[%s4 + $0x2c] sm:$0xf] %v454
    %471 = vst [vmem:[%s4 + $0x30] sm:$0xf] %v455
    %472 = vst [vmem:[%s4 + $0x34] sm:$0xf] %v456
    %473 = vst [vmem:[%s4 + $0x38] sm:$0xf] %v457
    %474 = vst [vmem:[%s4 + $0x3c] sm:$0xf] %v458
  $region25: #{gcn_forward_prepared.4} parent=0 // pred_fallthru
    _
  // Predicated region
  $region26: #{gcn_forward_prepared.4} parent=0 // pred_check
    _
  $region27: #{gcn_forward_prepared.4} parent=0 // pred_check_branch
    %476 = sbr.rel (0) target = $region29
  $region28: #{gcn_forward_prepared.4} parent=0 // pred_region
    _
  $region29: #{gcn_forward_prepared.4} parent=0 // pred_fallthru
    _
  // Predicated region
  $region30: #{gcn_forward_prepared.4} parent=0 // pred_check
    _
  $region31: #{gcn_forward_prepared.4} parent=0 // pred_check_branch
    %478 = sbr.rel (0) target = $region33
  $region32: #{gcn_forward_prepared.4} parent=0 // pred_region
    _
  $region33: #{gcn_forward_prepared.4} parent=0 // pred_fallthru
    _

</llo_original>
